<compile_context>
chip_gen: v5e
topology: v5e:2x2
jax: 0.10.0
libtpu: 0.0.40
codegen_flags: <defaults>
</compile_context>

<pallas_src>
import jax
import jax.numpy as jnp
from jax import lax
from jax.experimental import pallas as pl
from jax.experimental.pallas import tpu as pltpu


# ---------------------------------------------------------------------------
# Kernel
# ---------------------------------------------------------------------------
def _fused_etm_kernel(rho_ref, alphas_ref, x_ref, o_ref, w_ref):
    # ---- one-shot precompute: w_sm = softmax(rho @ alphas.T, axis=0) -------
    # Grid axis 0 is "arbitrary" (sequential), so the scratch written at the
    # first grid step persists and is reused by every later N tile.
    @pl.when(pl.program_id(0) == 0)
    def _():
        # Contract E (dim 1) of rho with E (dim 1) of alphas so no transpose
        # of alphas is materialized in VMEM.
        logits = lax.dot_general(
            rho_ref[...],
            alphas_ref[...],
            dimension_numbers=(((1,), (1,)), ((), ())),
            preferred_element_type=jnp.float32,
        )
        # Column softmax (softmax over dim=0, the voc axis).
        m = jnp.max(logits, axis=0, keepdims=True)
        e = jnp.exp(logits - m)
        s = jnp.sum(e, axis=0, keepdims=True)
        # Exact reciprocal: runs once per forward pass; keeps the 1e-5 match
        # against the f32 reference.
        w_ref[...] = e * pl.reciprocal(s, approx=False)

    # ---- hot loop: one MXU matmul per N tile, stored in the caller's dtype --
    o_ref[...] = jnp.dot(
        w_ref[...], x_ref[...], preferred_element_type=jnp.float32
    ).astype(o_ref.dtype)


# ---------------------------------------------------------------------------
# Wrapper
# ---------------------------------------------------------------------------
def _round_up(a, m):
    return ((a + m - 1) // m) * m


def _fused_vmem_bytes(V, E, T, tn):
    """Approximate VMEM footprint (lane/sublane padded, inputs double-buffered)."""
    f32 = 4
    rho_b = 2 * _round_up(V, 8) * _round_up(E, 128) * f32
    alphas_b = 2 * _round_up(T, 8) * _round_up(E, 128) * f32
    x_b = 2 * _round_up(T, 8) * _round_up(tn, 128) * f32
    out_b = 2 * _round_up(V, 8) * _round_up(tn, 128) * f32
    w_scr_b = _round_up(V, 8) * _round_up(T, 128) * f32
    return rho_b + alphas_b + x_b + out_b + w_scr_b


# Double-buffered working-set budget: leaves ample headroom on v7x's
# 64 MiB-per-TensorCore physical VMEM and is trivially fine on v5e/v6e.
_WORKING_SET_BUDGET = 32 * 1024 * 1024
_TN_CAP = 2048


def conv1d_softmax_etm(rho, alphas, x, t=0):
    # `t` only selects between two identical branches in the PyTorch module,
    # so it does not affect the computation.
    del t
    V, E = rho.shape
    T, E2 = alphas.shape
    assert E == E2
    x2d = x.reshape(-1, x.shape[-1])  # x.view(-1, x.size(-1))
    assert x2d.shape[0] == T, "flattened x rows must equal topic_size"
    N = x2d.shape[1]
    out_dtype = x2d.dtype

    # ---- N-tile selection: full N if it fits the budget, otherwise the
    # largest multiple of 128 (lane-dense, unmasked stores) that does. --------
    candidates = []
    if N <= _TN_CAP:
        candidates.append(N)  # full-array dim: exempt from the 128 rule
    candidates += [c for c in (2048, 1024, 512, 256, 128) if c < N]
    tn = candidates[-1]
    for c in candidates:
        if _fused_vmem_bytes(V, E, T, c) <= _WORKING_SET_BUDGET:
            tn = c
            break
    # TODO(synk): if rho itself (V*E f32, double-buffered) exceeds the VMEM
    # budget (very large vocabularies), this needs a two-stage fallback with a
    # V-tiled two-pass column softmax; typical ETM sizes fit easily.

    grid = (pl.cdiv(N, tn),)
    need = _fused_vmem_bytes(V, E, T, tn)
    vmem_limit = min(64 * 1024 * 1024, max(32 * 1024 * 1024, (need * 5) // 4))

    return pl.pallas_call(
        _fused_etm_kernel,
        out_shape=jax.ShapeDtypeStruct((V, N), out_dtype),
        grid_spec=pltpu.PrefetchScalarGridSpec(
            num_scalar_prefetch=0,
            grid=grid,
            in_specs=[
                # Grid-invariant blocks: DMA'd once, reused for every N tile.
                pl.BlockSpec((V, E), lambda j: (0, 0)),   # rho
                pl.BlockSpec((T, E), lambda j: (0, 0)),   # alphas
                # x streamed exactly once: block index depends only on j, and
                # the contraction dim T is an (unpadded) full-array block.
                pl.BlockSpec((T, tn), lambda j: (0, j)),  # x
            ],
            out_specs=pl.BlockSpec((V, tn), lambda j: (0, j)),
            scratch_shapes=[pltpu.VMEM((V, T), jnp.float32)],  # w_sm scratch
        ),
        compiler_params=pltpu.CompilerParams(
            # The compute-once scratch init requires sequential grid order.
            # TODO(synk): splitting N across v7x's two TensorCores would need a
            # per-core-safe w_sm init (or per-tile recompute); not worth the
            # redundant V*E*T matmul per tile at these sizes.
            dimension_semantics=("arbitrary",),
            vmem_limit_bytes=vmem_limit,
        ),
        cost_estimate=pl.CostEstimate(
            flops=2 * V * E * T + 2 * V * T * N,
            transcendentals=V * T,
            bytes_accessed=(
                rho.dtype.itemsize * V * E
                + alphas.dtype.itemsize * T * E
                + x2d.dtype.itemsize * T * N
                + x2d.dtype.itemsize * V * N
            ),
        ),
    )(rho, alphas, x2d)


# ---------------------------------------------------------------------------
# Reference + test
# ---------------------------------------------------------------------------
def reference(rho, alphas, x):
    w = rho @ alphas.T
    w = jax.nn.softmax(w, axis=0)
    return w @ x.reshape(-1, x.shape[-1])


def _run_case(key, voc_size, topic_size, emb_size, n_cols):
    k_rho, k_alpha, k_x = jax.random.split(key, 3)
    # nn.init.normal_(w, std=0.02) equivalents, deterministic.
    rho = 0.02 * jax.random.normal(k_rho, (voc_size, emb_size), jnp.float32)
    alphas = 0.02 * jax.random.normal(
        k_alpha, (topic_size, emb_size), jnp.float32
    )
    x = jax.random.normal(k_x, (topic_size, n_cols), jnp.float32)

    out = conv1d_softmax_etm(rho, alphas, x, t=0)
    out = jax.block_until_ready(out)

    ref = reference(rho, alphas, x)
    assert out.shape == (voc_size, n_cols)
    assert out.dtype == x.dtype
    assert jnp.allclose(out, ref, atol=1e-5, rtol=1e-5)


if __name__ == "__main__":
    key = jax.random.PRNGKey(0)
    k0, k1 = jax.random.split(key)

    # Aligned, representative shapes.
    _run_case(k0, voc_size=512, topic_size=16, emb_size=64, n_cols=256)
    # Ragged shapes: exercises the cdiv / full-dim-block edge handling.
    _run_case(k1, voc_size=384, topic_size=10, emb_size=96, n_cols=200)

    print("KERNEL_OK")
</pallas_src>

<mosaic_0001>
module attributes {stable_mosaic.version = 11 : i64} {
  func.func @_fused_etm_kernel(%arg0: i32, %arg1: memref<512x64xf32, #tpu.memory_space<vmem>>, %arg2: memref<16x64xf32, #tpu.memory_space<vmem>>, %arg3: memref<16x256xf32, #tpu.memory_space<vmem>>, %arg4: memref<512x256xf32, #tpu.memory_space<vmem>>, %arg5: memref<512x16xf32, #tpu.memory_space<vmem>>) attributes {dimension_semantics = [#tpu.dimension_semantics<arbitrary>], iteration_bounds = array<i64: 1>, scalar_prefetch = 0 : i64, scratch_operands = 1 : i64, tpu.core_type = #tpu.core_type<tc>, window_params = [{pipeline_mode = #tpu.pipeline_mode<synchronous>, transform_indices = @transform_0, window_bounds = array<i64: 512, 64>}, {pipeline_mode = #tpu.pipeline_mode<synchronous>, transform_indices = @transform_1, window_bounds = array<i64: 16, 64>}, {transform_indices = @transform_2, window_bounds = array<i64: 16, 256>}, {transform_indices = @transform_3, window_bounds = array<i64: 512, 256>}]} {
    %c0_i32 = arith.constant 0 : i32
    %0 = arith.cmpi eq, %arg0, %c0_i32 : i32
    %1 = arith.extui %0 : i1 to i32
    %c0_i32_0 = arith.constant 0 : i32
    %2 = arith.cmpi ne, %1, %c0_i32_0 : i32
    scf.if %2 {
      %c0_6 = arith.constant 0 : index
      %c0_7 = arith.constant 0 : index
      %7 = vector.load %arg1[%c0_6, %c0_7] : memref<512x64xf32, #tpu.memory_space<vmem>>, vector<512x64xf32>
      %c0_8 = arith.constant 0 : index
      %c0_9 = arith.constant 0 : index
      %8 = vector.load %arg2[%c0_8, %c0_9] : memref<16x64xf32, #tpu.memory_space<vmem>>, vector<16x64xf32>
      %cst_10 = arith.constant dense<0.000000e+00> : vector<512x16xf32>
      %9 = tpu.matmul %7, %8, %cst_10 {dimension_numbers = #tpu.dot_dimension_numbers<[1], [1], [0], [0], [0, 0, 1, 0], [], []>} : vector<512x64xf32>, vector<16x64xf32>, vector<512x16xf32> -> vector<512x16xf32>
      %cst_11 = arith.constant dense<0xFF800000> : vector<16xf32>
      %10 = vector.multi_reduction <maximumf>, %9, %cst_11 [0] : vector<512x16xf32> to vector<16xf32>
      %11 = vector.shape_cast %10 : vector<16xf32> to vector<1x16xf32>
      %12 = vector.broadcast %11 : vector<1x16xf32> to vector<512x16xf32>
      %13 = arith.subf %9, %12 : vector<512x16xf32>
      %14 = math.exp %13 : vector<512x16xf32>
      %cst_12 = arith.constant dense<0.000000e+00> : vector<16xf32>
      %15 = vector.multi_reduction <add>, %14, %cst_12 [0] : vector<512x16xf32> to vector<16xf32>
      %16 = vector.shape_cast %15 : vector<16xf32> to vector<1x16xf32>
      %17 = tpu.reciprocal %16 : vector<1x16xf32> -> vector<1x16xf32>
      %18 = vector.broadcast %17 : vector<1x16xf32> to vector<512x16xf32>
      %19 = arith.mulf %14, %18 : vector<512x16xf32>
      %c0_13 = arith.constant 0 : index
      %c0_14 = arith.constant 0 : index
      %20 = vector.load %arg5[%c0_13, %c0_14] : memref<512x16xf32, #tpu.memory_space<vmem>>, vector<512x16xf32>
      tpu.vector_store %arg5[%c0_13, %c0_14], %19 {strides = array<i32>} : memref<512x16xf32, #tpu.memory_space<vmem>>, vector<512x16xf32>,
    } else {
    }
    %c0 = arith.constant 0 : index
    %c0_1 = arith.constant 0 : index
    %3 = vector.load %arg5[%c0, %c0_1] : memref<512x16xf32, #tpu.memory_space<vmem>>, vector<512x16xf32>
    %c0_2 = arith.constant 0 : index
    %c0_3 = arith.constant 0 : index
    %4 = vector.load %arg3[%c0_2, %c0_3] : memref<16x256xf32, #tpu.memory_space<vmem>>, vector<16x256xf32>
    %cst = arith.constant dense<0.000000e+00> : vector<512x256xf32>
    %5 = tpu.matmul %3, %4, %cst {dimension_numbers = #tpu.dot_dimension_numbers<[1], [0], [0], [1], [0, 0, 1, 1], [], []>} : vector<512x16xf32>, vector<16x256xf32>, vector<512x256xf32> -> vector<512x256xf32>
    %c0_4 = arith.constant 0 : index
    %c0_5 = arith.constant 0 : index
    %6 = vector.load %arg4[%c0_4, %c0_5] : memref<512x256xf32, #tpu.memory_space<vmem>>, vector<512x256xf32>
    tpu.vector_store %arg4[%c0_4, %c0_5], %5 {strides = array<i32>} : memref<512x256xf32, #tpu.memory_space<vmem>>, vector<512x256xf32>,
    return
  }
  func.func @transform_0(%arg0: i32) -> (i32, i32) {
    %c0_i32 = arith.constant 0 : i32
    %c0_i32_0 = arith.constant 0 : i32
    %c0_i32_1 = arith.constant 0 : i32
    return %c0_i32, %c0_i32_0 : i32, i32
  }
  func.func @transform_1(%arg0: i32) -> (i32, i32) {
    %c0_i32 = arith.constant 0 : i32
    %c0_i32_0 = arith.constant 0 : i32
    %c0_i32_1 = arith.constant 0 : i32
    return %c0_i32, %c0_i32_0 : i32, i32
  }
  func.func @transform_2(%arg0: i32) -> (i32, i32) {
    %c0_i32 = arith.constant 0 : i32
    %c0_i32_0 = arith.constant 0 : i32
    return %c0_i32, %arg0 : i32, i32
  }
  func.func @transform_3(%arg0: i32) -> (i32, i32) {
    %c0_i32 = arith.constant 0 : i32
    %c0_i32_0 = arith.constant 0 : i32
    return %c0_i32, %arg0 : i32, i32
  }
}

</mosaic_0001>

<llo_original>
// kernel: tpu_custom_call.1
$region0: #{tpu_custom_call.1}
  #allocation0 [shape = 'u32[]', space=smem, size = 0x4, offset = 0x4, fixed_abs, tag = 'smem constant byte address 0x4 - core index']
  #allocation1 [shape = 'u32[72,128]{1,0:T(1,128)}', space=vmem, size = 0x9000, scoped, tag = 'internal scratch']
  #allocation2 [shape = 'f32[512,16]{1,0:T(8,128)}', space=vmem, size = 0x40000, scoped, tag = 'scratch operand']
  %s0 = inlined_call_operand.vmem [shape: f32[512,64], index: 0, kind: input, shape index: {}]
  %s1 = inlined_call_operand.vmem [shape: f32[16,64], index: 1, kind: input, shape index: {}]
  %s2 = inlined_call_operand.vmem [shape: f32[16,256], index: 2, kind: input, shape index: {}]
  %s3 = inlined_call_operand.hbm [shape: f32[512,256], index: 3, kind: output, shape index: {}]
  %s4 = sld [smem:[#allocation0]]
  $region26: #{tpu_custom_call.1} parent=0
    _
  %s6 = ssub.s32 1, %s4
  %s7 = scalar_select 0, %s6, %s4
  $region1: #{tpu_custom_call.1} parent=0
    #allocation3 [shape = 'u8[524288]{0}', space=vmem, size = 0x80000, scoped, tag = 'output window, operand 0, single buffered']
    #allocation4 [shape = 's32[1]{0}', space=sflag, size = 0x4, scoped, tag = 'scoped memory for tpu_custom_call.1']
    %8 = vsyncpa [#allocation4], 0
    // Predicated region
    $region2: #{tpu_custom_call.1} parent=1 // pred_check
      _
    $region3: #{tpu_custom_call.1} parent=1 // pred_check_branch
      %10 = sbr.rel (0) target = $region5
    $region4: #{tpu_custom_call.1} parent=1 // pred_region
      _
    $region5: #{tpu_custom_call.1} parent=1 // pred_fallthru
      _
    // Predicated region
    $region6: #{tpu_custom_call.1} parent=1 // pred_check
      _
    $region7: #{tpu_custom_call.1} parent=1 // pred_check_branch
      %12 = sbr.rel (0) target = $region9
    $region8: #{tpu_custom_call.1} parent=1 // pred_region
      _
    $region9: #{tpu_custom_call.1} parent=1 // pred_fallthru
      _
    // Predicated region
    $region10: #{tpu_custom_call.1} parent=1 // pred_check
      _
    $region11: #{tpu_custom_call.1} parent=1 // pred_check_branch
      %14 = sbr.rel (0) target = $region13
    $region12: #{tpu_custom_call.1} parent=1 // pred_region
      _
    $region13: #{tpu_custom_call.1} parent=1 // pred_fallthru
      _
    %p15 = scmp.eq.s32.totalorder 0, 0
    // Predicated region
    $region14: #{tpu_custom_call.1} parent=1 // pred_check
      %p16 = pneg %p15
    $region15: #{tpu_custom_call.1} parent=1 // pred_check_branch
      %18 = sbr.rel (%p16) target = $region17
    $region16: #{tpu_custom_call.1} parent=1 // pred_region
      %v19 = vld [vmem:[%s0] sm:$0xff]
      %v20 = vld [vmem:[%s0 + $0x8] sm:$0xff]
      %v21 = vld [vmem:[%s0 + $0x10] sm:$0xff]
      %v22 = vld [vmem:[%s0 + $0x18] sm:$0xff]
      %v23 = vld [vmem:[%s0 + $0x20] sm:$0xff]
      %v24 = vld [vmem:[%s0 + $0x28] sm:$0xff]
      %v25 = vld [vmem:[%s0 + $0x30] sm:$0xff]
      %v26 = vld [vmem:[%s0 + $0x38] sm:$0xff]
      %v27 = vld [vmem:[%s0 + $0x40] sm:$0xff]
      %v28 = vld [vmem:[%s0 + $0x48] sm:$0xff]
      %v29 = vld [vmem:[%s0 + $0x50] sm:$0xff]
      %v30 = vld [vmem:[%s0 + $0x58] sm:$0xff]
      %v31 = vld [vmem:[%s0 + $0x60] sm:$0xff]
      %v32 = vld [vmem:[%s0 + $0x68] sm:$0xff]
      %v33 = vld [vmem:[%s0 + $0x70] sm:$0xff]
      %v34 = vld [vmem:[%s0 + $0x78] sm:$0xff]
      %v35 = vld [vmem:[%s0 + $0x80] sm:$0xff]
      %v36 = vld [vmem:[%s0 + $0x88] sm:$0xff]
      %v37 = vld [vmem:[%s0 + $0x90] sm:$0xff]
      %v38 = vld [vmem:[%s0 + $0x98] sm:$0xff]
      %v39 = vld [vmem:[%s0 + $0xa0] sm:$0xff]
      %v40 = vld [vmem:[%s0 + $0xa8] sm:$0xff]
      %v41 = vld [vmem:[%s0 + $0xb0] sm:$0xff]
      %v42 = vld [vmem:[%s0 + $0xb8] sm:$0xff]
      %v43 = vld [vmem:[%s0 + $0xc0] sm:$0xff]
      %v44 = vld [vmem:[%s0 + $0xc8] sm:$0xff]
      %v45 = vld [vmem:[%s0 + $0xd0] sm:$0xff]
      %v46 = vld [vmem:[%s0 + $0xd8] sm:$0xff]
      %v47 = vld [vmem:[%s0 + $0xe0] sm:$0xff]
      %v48 = vld [vmem:[%s0 + $0xe8] sm:$0xff]
      %v49 = vld [vmem:[%s0 + $0xf0] sm:$0xff]
      %v50 = vld [vmem:[%s0 + $0xf8] sm:$0xff]
      %v51 = vld [vmem:[%s0 + $0x100] sm:$0xff]
      %v52 = vld [vmem:[%s0 + $0x108] sm:$0xff]
      %v53 = vld [vmem:[%s0 + $0x110] sm:$0xff]
      %v54 = vld [vmem:[%s0 + $0x118] sm:$0xff]
      %v55 = vld [vmem:[%s0 + $0x120] sm:$0xff]
      %v56 = vld [vmem:[%s0 + $0x128] sm:$0xff]
      %v57 = vld [vmem:[%s0 + $0x130] sm:$0xff]
      %v58 = vld [vmem:[%s0 + $0x138] sm:$0xff]
      %v59 = vld [vmem:[%s0 + $0x140] sm:$0xff]
      %v60 = vld [vmem:[%s0 + $0x148] sm:$0xff]
      %v61 = vld [vmem:[%s0 + $0x150] sm:$0xff]
      %v62 = vld [vmem:[%s0 + $0x158] sm:$0xff]
      %v63 = vld [vmem:[%s0 + $0x160] sm:$0xff]
      %v64 = vld [vmem:[%s0 + $0x168] sm:$0xff]
      %v65 = vld [vmem:[%s0 + $0x170] sm:$0xff]
      %v66 = vld [vmem:[%s0 + $0x178] sm:$0xff]
      %v67 = vld [vmem:[%s0 + $0x180] sm:$0xff]
      %v68 = vld [vmem:[%s0 + $0x188] sm:$0xff]
      %v69 = vld [vmem:[%s0 + $0x190] sm:$0xff]
      %v70 = vld [vmem:[%s0 + $0x198] sm:$0xff]
      %v71 = vld [vmem:[%s0 + $0x1a0] sm:$0xff]
      %v72 = vld [vmem:[%s0 + $0x1a8] sm:$0xff]
      %v73 = vld [vmem:[%s0 + $0x1b0] sm:$0xff]
      %v74 = vld [vmem:[%s0 + $0x1b8] sm:$0xff]
      %v75 = vld [vmem:[%s0 + $0x1c0] sm:$0xff]
      %v76 = vld [vmem:[%s0 + $0x1c8] sm:$0xff]
      %v77 = vld [vmem:[%s0 + $0x1d0] sm:$0xff]
      %v78 = vld [vmem:[%s0 + $0x1d8] sm:$0xff]
      %v79 = vld [vmem:[%s0 + $0x1e0] sm:$0xff]
      %v80 = vld [vmem:[%s0 + $0x1e8] sm:$0xff]
      %v81 = vld [vmem:[%s0 + $0x1f0] sm:$0xff]
      %v82 = vld [vmem:[%s0 + $0x1f8] sm:$0xff]
      %v83 = vld [vmem:[%s1] sm:$0xff]
      %v84 = vld [vmem:[%s1 + $0x8] sm:$0xff]
      %vm85 = vcmask 523264
      %v87 = vsel %vm85, %v19, 0
      %v90 = vsel %vm85, %v20, 0
      %v93 = vsel %vm85, %v21, 0
      %v96 = vsel %vm85, %v22, 0
      %v99 = vsel %vm85, %v23, 0
      %v102 = vsel %vm85, %v24, 0
      %v105 = vsel %vm85, %v25, 0
      %v108 = vsel %vm85, %v26, 0
      %v111 = vsel %vm85, %v27, 0
      %v114 = vsel %vm85, %v28, 0
      %v117 = vsel %vm85, %v29, 0
      %v120 = vsel %vm85, %v30, 0
      %v123 = vsel %vm85, %v31, 0
      %v126 = vsel %vm85, %v32, 0
      %v129 = vsel %vm85, %v33, 0
      %v132 = vsel %vm85, %v34, 0
      %v135 = vsel %vm85, %v35, 0
      %v138 = vsel %vm85, %v36, 0
      %v141 = vsel %vm85, %v37, 0
      %v144 = vsel %vm85, %v38, 0
      %v147 = vsel %vm85, %v39, 0
      %v150 = vsel %vm85, %v40, 0
      %v153 = vsel %vm85, %v41, 0
      %v156 = vsel %vm85, %v42, 0
      %v159 = vsel %vm85, %v43, 0
      %v162 = vsel %vm85, %v44, 0
      %v165 = vsel %vm85, %v45, 0
      %v168 = vsel %vm85, %v46, 0
      %v171 = vsel %vm85, %v47, 0
      %v174 = vsel %vm85, %v48, 0
      %v177 = vsel %vm85, %v49, 0
      %v180 = vsel %vm85, %v50, 0
      %v183 = vsel %vm85, %v51, 0
      %v186 = vsel %vm85, %v52, 0
      %v189 = vsel %vm85, %v53, 0
      %v192 = vsel %vm85, %v54, 0
      %v195 = vsel %vm85, %v55, 0
      %v198 = vsel %vm85, %v56, 0
      %v201 = vsel %vm85, %v57, 0
      %v204 = vsel %vm85, %v58, 0
      %v207 = vsel %vm85, %v59, 0
      %v210 = vsel %vm85, %v60, 0
      %v213 = vsel %vm85, %v61, 0
      %v216 = vsel %vm85, %v62, 0
      %v219 = vsel %vm85, %v63, 0
      %v222 = vsel %vm85, %v64, 0
      %v225 = vsel %vm85, %v65, 0
      %v228 = vsel %vm85, %v66, 0
      %v231 = vsel %vm85, %v67, 0
      %v234 = vsel %vm85, %v68, 0
      %v237 = vsel %vm85, %v69, 0
      %v240 = vsel %vm85, %v70, 0
      %v243 = vsel %vm85, %v71, 0
      %v246 = vsel %vm85, %v72, 0
      %v249 = vsel %vm85, %v73, 0
      %v252 = vsel %vm85, %v74, 0
      %v255 = vsel %vm85, %v75, 0
      %v258 = vsel %vm85, %v76, 0
      %v261 = vsel %vm85, %v77, 0
      %v264 = vsel %vm85, %v78, 0
      %v267 = vsel %vm85, %v79, 0
      %v270 = vsel %vm85, %v80, 0
      %v273 = vsel %vm85, %v81, 0
      %v276 = vsel %vm85, %v82, 0
      %v279 = vsel %vm85, %v83, 0
      %v282 = vsel %vm85, %v84, 0
      %284 = vmatpush.xpose.msra.mxu0 0.0
      %285 = vmatpush.xpose.msra.mxu0 0.0
      %286 = vmatpush.xpose.msra.mxu0 0.0
      %287 = vmatpush.xpose.msra.mxu0 0.0
      %288 = vmatpush.xpose.msra.mxu0 0.0
      %289 = vmatpush.xpose.msra.mxu0 0.0
      %290 = vmatpush.xpose.msra.mxu0 0.0
      %291 = vmatpush.xpose.msra.mxu0 0.0
      %292 = vmatpush.xpose.msra.mxu0 0.0
      %293 = vmatpush.xpose.msra.mxu0 0.0
      %294 = vmatpush.xpose.msra.mxu0 0.0
      %295 = vmatpush.xpose.msra.mxu0 0.0
      %296 = vmatpush.xpose.msra.mxu0 0.0
      %297 = vmatpush.xpose.msra.mxu0 0.0
      %298 = vmatpush.xpose.msra.mxu0 %v282
      %299 = vmatpush.xpose.msra.mxu0 %v279
      %300 = vmatmul.f32.gmra.mxu0 %v87
      %v301 = vpop.f32.mrf.mxu0
      %v302 = vadd.f32 0.0, %v301
      %303 = vmatmul.f32.gmra.mxu0 %v90
      %v304 = vpop.f32.mrf.mxu0
      %v305 = vadd.f32 0.0, %v304
      %306 = vmatmul.f32.gmra.mxu0 %v93
      %v307 = vpop.f32.mrf.mxu0
      %v308 = vadd.f32 0.0, %v307
      %309 = vmatmul.f32.gmra.mxu0 %v96
      %v310 = vpop.f32.mrf.mxu0
      %v311 = vadd.f32 0.0, %v310
      %312 = vmatmul.f32.gmra.mxu0 %v99
      %v313 = vpop.f32.mrf.mxu0
      %v314 = vadd.f32 0.0, %v313
      %315 = vmatmul.f32.gmra.mxu0 %v102
      %v316 = vpop.f32.mrf.mxu0
      %v317 = vadd.f32 0.0, %v316
      %318 = vmatmul.f32.gmra.mxu0 %v105
      %v319 = vpop.f32.mrf.mxu0
      %v320 = vadd.f32 0.0, %v319
      %321 = vmatmul.f32.gmra.mxu0 %v108
      %v322 = vpop.f32.mrf.mxu0
      %v323 = vadd.f32 0.0, %v322
      %324 = vmatmul.f32.gmra.mxu0 %v111
      %v325 = vpop.f32.mrf.mxu0
      %v326 = vadd.f32 0.0, %v325
      %327 = vmatmul.f32.gmra.mxu0 %v114
      %v328 = vpop.f32.mrf.mxu0
      %v329 = vadd.f32 0.0, %v328
      %330 = vmatmul.f32.gmra.mxu0 %v117
      %v331 = vpop.f32.mrf.mxu0
      %v332 = vadd.f32 0.0, %v331
      %333 = vmatmul.f32.gmra.mxu0 %v120
      %v334 = vpop.f32.mrf.mxu0
      %v335 = vadd.f32 0.0, %v334
      %336 = vmatmul.f32.gmra.mxu0 %v123
      %v337 = vpop.f32.mrf.mxu0
      %v338 = vadd.f32 0.0, %v337
      %339 = vmatmul.f32.gmra.mxu0 %v126
      %v340 = vpop.f32.mrf.mxu0
      %v341 = vadd.f32 0.0, %v340
      %342 = vmatmul.f32.gmra.mxu0 %v129
      %v343 = vpop.f32.mrf.mxu0
      %v344 = vadd.f32 0.0, %v343
      %345 = vmatmul.f32.gmra.mxu0 %v132
      %v346 = vpop.f32.mrf.mxu0
      %v347 = vadd.f32 0.0, %v346
      %348 = vmatmul.f32.gmra.mxu0 %v135
      %v349 = vpop.f32.mrf.mxu0
      %v350 = vadd.f32 0.0, %v349
      %351 = vmatmul.f32.gmra.mxu0 %v138
      %v352 = vpop.f32.mrf.mxu0
      %v353 = vadd.f32 0.0, %v352
      %354 = vmatmul.f32.gmra.mxu0 %v141
      %v355 = vpop.f32.mrf.mxu0
      %v356 = vadd.f32 0.0, %v355
      %357 = vmatmul.f32.gmra.mxu0 %v144
      %v358 = vpop.f32.mrf.mxu0
      %v359 = vadd.f32 0.0, %v358
      %360 = vmatmul.f32.gmra.mxu0 %v147
      %v361 = vpop.f32.mrf.mxu0
      %v362 = vadd.f32 0.0, %v361
      %363 = vmatmul.f32.gmra.mxu0 %v150
      %v364 = vpop.f32.mrf.mxu0
      %v365 = vadd.f32 0.0, %v364
      %366 = vmatmul.f32.gmra.mxu0 %v153
      %v367 = vpop.f32.mrf.mxu0
      %v368 = vadd.f32 0.0, %v367
      %369 = vmatmul.f32.gmra.mxu0 %v156
      %v370 = vpop.f32.mrf.mxu0
      %v371 = vadd.f32 0.0, %v370
      %372 = vmatmul.f32.gmra.mxu0 %v159
      %v373 = vpop.f32.mrf.mxu0
      %v374 = vadd.f32 0.0, %v373
      %375 = vmatmul.f32.gmra.mxu0 %v162
      %v376 = vpop.f32.mrf.mxu0
      %v377 = vadd.f32 0.0, %v376
      %378 = vmatmul.f32.gmra.mxu0 %v165
      %v379 = vpop.f32.mrf.mxu0
      %v380 = vadd.f32 0.0, %v379
      %381 = vmatmul.f32.gmra.mxu0 %v168
      %v382 = vpop.f32.mrf.mxu0
      %v383 = vadd.f32 0.0, %v382
      %384 = vmatmul.f32.gmra.mxu0 %v171
      %v385 = vpop.f32.mrf.mxu0
      %v386 = vadd.f32 0.0, %v385
      %387 = vmatmul.f32.gmra.mxu0 %v174
      %v388 = vpop.f32.mrf.mxu0
      %v389 = vadd.f32 0.0, %v388
      %390 = vmatmul.f32.gmra.mxu0 %v177
      %v391 = vpop.f32.mrf.mxu0
      %v392 = vadd.f32 0.0, %v391
      %393 = vmatmul.f32.gmra.mxu0 %v180
      %v394 = vpop.f32.mrf.mxu0
      %v395 = vadd.f32 0.0, %v394
      %396 = vmatmul.f32.gmra.mxu0 %v183
      %v397 = vpop.f32.mrf.mxu0
      %v398 = vadd.f32 0.0, %v397
      %399 = vmatmul.f32.gmra.mxu0 %v186
      %v400 = vpop.f32.mrf.mxu0
      %v401 = vadd.f32 0.0, %v400
      %402 = vmatmul.f32.gmra.mxu0 %v189
      %v403 = vpop.f32.mrf.mxu0
      %v404 = vadd.f32 0.0, %v403
      %405 = vmatmul.f32.gmra.mxu0 %v192
      %v406 = vpop.f32.mrf.mxu0
      %v407 = vadd.f32 0.0, %v406
      %408 = vmatmul.f32.gmra.mxu0 %v195
      %v409 = vpop.f32.mrf.mxu0
      %v410 = vadd.f32 0.0, %v409
      %411 = vmatmul.f32.gmra.mxu0 %v198
      %v412 = vpop.f32.mrf.mxu0
      %v413 = vadd.f32 0.0, %v412
      %414 = vmatmul.f32.gmra.mxu0 %v201
      %v415 = vpop.f32.mrf.mxu0
      %v416 = vadd.f32 0.0, %v415
      %417 = vmatmul.f32.gmra.mxu0 %v204
      %v418 = vpop.f32.mrf.mxu0
      %v419 = vadd.f32 0.0, %v418
      %420 = vmatmul.f32.gmra.mxu0 %v207
      %v421 = vpop.f32.mrf.mxu0
      %v422 = vadd.f32 0.0, %v421
      %423 = vmatmul.f32.gmra.mxu0 %v210
      %v424 = vpop.f32.mrf.mxu0
      %v425 = vadd.f32 0.0, %v424
      %426 = vmatmul.f32.gmra.mxu0 %v213
      %v427 = vpop.f32.mrf.mxu0
      %v428 = vadd.f32 0.0, %v427
      %429 = vmatmul.f32.gmra.mxu0 %v216
      %v430 = vpop.f32.mrf.mxu0
      %v431 = vadd.f32 0.0, %v430
      %432 = vmatmul.f32.gmra.mxu0 %v219
      %v433 = vpop.f32.mrf.mxu0
      %v434 = vadd.f32 0.0, %v433
      %435 = vmatmul.f32.gmra.mxu0 %v222
      %v436 = vpop.f32.mrf.mxu0
      %v437 = vadd.f32 0.0, %v436
      %438 = vmatmul.f32.gmra.mxu0 %v225
      %v439 = vpop.f32.mrf.mxu0
      %v440 = vadd.f32 0.0, %v439
      %441 = vmatmul.f32.gmra.mxu0 %v228
      %v442 = vpop.f32.mrf.mxu0
      %v443 = vadd.f32 0.0, %v442
      %444 = vmatmul.f32.gmra.mxu0 %v231
      %v445 = vpop.f32.mrf.mxu0
      %v446 = vadd.f32 0.0, %v445
      %447 = vmatmul.f32.gmra.mxu0 %v234
      %v448 = vpop.f32.mrf.mxu0
      %v449 = vadd.f32 0.0, %v448
      %450 = vmatmul.f32.gmra.mxu0 %v237
      %v451 = vpop.f32.mrf.mxu0
      %v452 = vadd.f32 0.0, %v451
      %453 = vmatmul.f32.gmra.mxu0 %v240
      %v454 = vpop.f32.mrf.mxu0
      %v455 = vadd.f32 0.0, %v454
      %456 = vmatmul.f32.gmra.mxu0 %v243
      %v457 = vpop.f32.mrf.mxu0
      %v458 = vadd.f32 0.0, %v457
      %459 = vmatmul.f32.gmra.mxu0 %v246
      %v460 = vpop.f32.mrf.mxu0
      %v461 = vadd.f32 0.0, %v460
      %462 = vmatmul.f32.gmra.mxu0 %v249
      %v463 = vpop.f32.mrf.mxu0
      %v464 = vadd.f32 0.0, %v463
      %465 = vmatmul.f32.gmra.mxu0 %v252
      %v466 = vpop.f32.mrf.mxu0
      %v467 = vadd.f32 0.0, %v466
      %468 = vmatmul.f32.gmra.mxu0 %v255
      %v469 = vpop.f32.mrf.mxu0
      %v470 = vadd.f32 0.0, %v469
      %471 = vmatmul.f32.gmra.mxu0 %v258
      %v472 = vpop.f32.mrf.mxu0
      %v473 = vadd.f32 0.0, %v472
      %474 = vmatmul.f32.gmra.mxu0 %v261
      %v475 = vpop.f32.mrf.mxu0
      %v476 = vadd.f32 0.0, %v475
      %477 = vmatmul.f32.gmra.mxu0 %v264
      %v478 = vpop.f32.mrf.mxu0
      %v479 = vadd.f32 0.0, %v478
      %480 = vmatmul.f32.gmra.mxu0 %v267
      %v481 = vpop.f32.mrf.mxu0
      %v482 = vadd.f32 0.0, %v481
      %483 = vmatmul.f32.gmra.mxu0 %v270
      %v484 = vpop.f32.mrf.mxu0
      %v485 = vadd.f32 0.0, %v484
      %486 = vmatmul.f32.gmra.mxu0 %v273
      %v487 = vpop.f32.mrf.mxu0
      %v488 = vadd.f32 0.0, %v487
      %489 = vmatmul.f32.gmra.mxu0 %v276
      %v490 = vpop.f32.mrf.mxu0
      %v491 = vadd.f32 0.0, %v490
      %492 = vdwg.mxu0
      %vm493 = vcmask 130048
      %v494 = vsel %vm493, %v302, -inf
      %v495 = vsel %vm493, %v305, -inf
      %v496 = vsel %vm493, %v308, -inf
      %v497 = vsel %vm493, %v311, -inf
      %v498 = vsel %vm493, %v314, -inf
      %v499 = vmax.f32 %v494, %v498
      %v500 = vsel %vm493, %v317, -inf
      %v501 = vmax.f32 %v495, %v500
      %v502 = vsel %vm493, %v320, -inf
      %v503 = vmax.f32 %v496, %v502
      %v504 = vsel %vm493, %v323, -inf
      %v505 = vmax.f32 %v497, %v504
      %v506 = vsel %vm493, %v326, -inf
      %v507 = vmax.f32 %v499, %v506
      %v508 = vsel %vm493, %v329, -inf
      %v509 = vmax.f32 %v501, %v508
      %v510 = vsel %vm493, %v332, -inf
      %v511 = vmax.f32 %v503, %v510
      %v512 = vsel %vm493, %v335, -inf
      %v513 = vmax.f32 %v505, %v512
      %v514 = vsel %vm493, %v338, -inf
      %v515 = vmax.f32 %v507, %v514
      %v516 = vsel %vm493, %v341, -inf
      %v517 = vmax.f32 %v509, %v516
      %v518 = vsel %vm493, %v344, -inf
      %v519 = vmax.f32 %v511, %v518
      %v520 = vsel %vm493, %v347, -inf
      %v521 = vmax.f32 %v513, %v520
      %v522 = vsel %vm493, %v350, -inf
      %v523 = vmax.f32 %v515, %v522
      %v524 = vsel %vm493, %v353, -inf
      %v525 = vmax.f32 %v517, %v524
      %v526 = vsel %vm493, %v356, -inf
      %v527 = vmax.f32 %v519, %v526
      %v528 = vsel %vm493, %v359, -inf
      %v529 = vmax.f32 %v521, %v528
      %v530 = vsel %vm493, %v362, -inf
      %v531 = vmax.f32 %v523, %v530
      %v532 = vsel %vm493, %v365, -inf
      %v533 = vmax.f32 %v525, %v532
      %v534 = vsel %vm493, %v368, -inf
      %v535 = vmax.f32 %v527, %v534
      %v536 = vsel %vm493, %v371, -inf
      %v537 = vmax.f32 %v529, %v536
      %v538 = vsel %vm493, %v374, -inf
      %v539 = vmax.f32 %v531, %v538
      %v540 = vsel %vm493, %v377, -inf
      %v541 = vmax.f32 %v533, %v540
      %v542 = vsel %vm493, %v380, -inf
      %v543 = vmax.f32 %v535, %v542
      %v544 = vsel %vm493, %v383, -inf
      %v545 = vmax.f32 %v537, %v544
      %v546 = vsel %vm493, %v386, -inf
      %v547 = vmax.f32 %v539, %v546
      %v548 = vsel %vm493, %v389, -inf
      %v549 = vmax.f32 %v541, %v548
      %v550 = vsel %vm493, %v392, -inf
      %v551 = vmax.f32 %v543, %v550
      %v552 = vsel %vm493, %v395, -inf
      %v553 = vmax.f32 %v545, %v552
      %v554 = vsel %vm493, %v398, -inf
      %v555 = vmax.f32 %v547, %v554
      %v556 = vsel %vm493, %v401, -inf
      %v557 = vmax.f32 %v549, %v556
      %v558 = vsel %vm493, %v404, -inf
      %v559 = vmax.f32 %v551, %v558
      %v560 = vsel %vm493, %v407, -inf
      %v561 = vmax.f32 %v553, %v560
      %v562 = vsel %vm493, %v410, -inf
      %v563 = vmax.f32 %v555, %v562
      %v564 = vsel %vm493, %v413, -inf
      %v565 = vmax.f32 %v557, %v564
      %v566 = vsel %vm493, %v416, -inf
      %v567 = vmax.f32 %v559, %v566
      %v568 = vsel %vm493, %v419, -inf
      %v569 = vmax.f32 %v561, %v568
      %v570 = vsel %vm493, %v422, -inf
      %v571 = vmax.f32 %v563, %v570
      %v572 = vsel %vm493, %v425, -inf
      %v573 = vmax.f32 %v565, %v572
      %v574 = vsel %vm493, %v428, -inf
      %v575 = vmax.f32 %v567, %v574
      %v576 = vsel %vm493, %v431, -inf
      %v577 = vmax.f32 %v569, %v576
      %v578 = vsel %vm493, %v434, -inf
      %v579 = vmax.f32 %v571, %v578
      %v580 = vsel %vm493, %v437, -inf
      %v581 = vmax.f32 %v573, %v580
      %v582 = vsel %vm493, %v440, -inf
      %v583 = vmax.f32 %v575, %v582
      %v584 = vsel %vm493, %v443, -inf
      %v585 = vmax.f32 %v577, %v584
      %v586 = vsel %vm493, %v446, -inf
      %v587 = vmax.f32 %v579, %v586
      %v588 = vsel %vm493, %v449, -inf
      %v589 = vmax.f32 %v581, %v588
      %v590 = vsel %vm493, %v452, -inf
      %v591 = vmax.f32 %v583, %v590
      %v592 = vsel %vm493, %v455, -inf
      %v593 = vmax.f32 %v585, %v592
      %v594 = vsel %vm493, %v458, -inf
      %v595 = vmax.f32 %v587, %v594
      %v596 = vsel %vm493, %v461, -inf
      %v597 = vmax.f32 %v589, %v596
      %v598 = vsel %vm493, %v464, -inf
      %v599 = vmax.f32 %v591, %v598
      %v600 = vsel %vm493, %v467, -inf
      %v601 = vmax.f32 %v593, %v600
      %v602 = vsel %vm493, %v470, -inf
      %v603 = vmax.f32 %v595, %v602
      %v604 = vsel %vm493, %v473, -inf
      %v605 = vmax.f32 %v597, %v604
      %v606 = vsel %vm493, %v476, -inf
      %v607 = vmax.f32 %v599, %v606
      %v608 = vsel %vm493, %v479, -inf
      %v609 = vmax.f32 %v601, %v608
      %v610 = vsel %vm493, %v482, -inf
      %v611 = vmax.f32 %v603, %v610
      %v612 = vsel %vm493, %v485, -inf
      %v613 = vmax.f32 %v605, %v612
      %v614 = vsel %vm493, %v488, -inf
      %v615 = vmax.f32 %v607, %v614
      %v616 = vsel %vm493, %v491, -inf
      %v617 = vmax.f32 %v609, %v616
      %v618 = vmax.f32 %v611, %v613
      %v619 = vmax.f32 %v615, %v617
      %v620 = vmax.f32 %v618, %v619
      %v621 = vrot.slane %v620, 4
      %v622 = vmax.f32 %v620, %v621
      %v623 = vrot.slane %v622, 2
      %v624 = vmax.f32 %v622, %v623
      %v625 = vrot.slane %v624, 1
      %v626 = vmax.f32 %v624, %v625
      %v627 = vsub.f32 %v302, %v626
      %v628 = vsub.f32 %v305, %v626
      %v629 = vsub.f32 %v308, %v626
      %v630 = vsub.f32 %v311, %v626
      %v631 = vsub.f32 %v314, %v626
      %v632 = vsub.f32 %v317, %v626
      %v633 = vsub.f32 %v320, %v626
      %v634 = vsub.f32 %v323, %v626
      %v635 = vsub.f32 %v326, %v626
      %v636 = vsub.f32 %v329, %v626
      %v637 = vsub.f32 %v332, %v626
      %v638 = vsub.f32 %v335, %v626
      %v639 = vsub.f32 %v338, %v626
      %v640 = vsub.f32 %v341, %v626
      %v641 = vsub.f32 %v344, %v626
      %v642 = vsub.f32 %v347, %v626
      %v643 = vsub.f32 %v350, %v626
      %v644 = vsub.f32 %v353, %v626
      %v645 = vsub.f32 %v356, %v626
      %v646 = vsub.f32 %v359, %v626
      %v647 = vsub.f32 %v362, %v626
      %v648 = vsub.f32 %v365, %v626
      %v649 = vsub.f32 %v368, %v626
      %v650 = vsub.f32 %v371, %v626
      %v651 = vsub.f32 %v374, %v626
      %v652 = vsub.f32 %v377, %v626
      %v653 = vsub.f32 %v380, %v626
      %v654 = vsub.f32 %v383, %v626
      %v655 = vsub.f32 %v386, %v626
      %v656 = vsub.f32 %v389, %v626
      %v657 = vsub.f32 %v392, %v626
      %v658 = vsub.f32 %v395, %v626
      %v659 = vsub.f32 %v398, %v626
      %v660 = vsub.f32 %v401, %v626
      %v661 = vsub.f32 %v404, %v626
      %v662 = vsub.f32 %v407, %v626
      %v663 = vsub.f32 %v410, %v626
      %v664 = vsub.f32 %v413, %v626
      %v665 = vsub.f32 %v416, %v626
      %v666 = vsub.f32 %v419, %v626
      %v667 = vsub.f32 %v422, %v626
      %v668 = vsub.f32 %v425, %v626
      %v669 = vsub.f32 %v428, %v626
      %v670 = vsub.f32 %v431, %v626
      %v671 = vsub.f32 %v434, %v626
      %v672 = vsub.f32 %v437, %v626
      %v673 = vsub.f32 %v440, %v626
      %v674 = vsub.f32 %v443, %v626
      %v675 = vsub.f32 %v446, %v626
      %v676 = vsub.f32 %v449, %v626
      %v677 = vsub.f32 %v452, %v626
      %v678 = vsub.f32 %v455, %v626
      %v679 = vsub.f32 %v458, %v626
      %v680 = vsub.f32 %v461, %v626
      %v681 = vsub.f32 %v464, %v626
      %v682 = vsub.f32 %v467, %v626
      %v683 = vsub.f32 %v470, %v626
      %v684 = vsub.f32 %v473, %v626
      %v685 = vsub.f32 %v476, %v626
      %v686 = vsub.f32 %v479, %v626
      %v687 = vsub.f32 %v482, %v626
      %v688 = vsub.f32 %v485, %v626
      %v689 = vsub.f32 %v488, %v626
      %v690 = vsub.f32 %v491, %v626
      %v691 = vmul.f32 %v627, 1.442695
      %v692 = vpow.pop %v691
      %v693 = vmul.f32 %v628, 1.442695
      %v694 = vpow.pop %v693
      %v695 = vmul.f32 %v629, 1.442695
      %v696 = vpow.pop %v695
      %v697 = vmul.f32 %v630, 1.442695
      %v698 = vpow.pop %v697
      %v699 = vmul.f32 %v631, 1.442695
      %v700 = vpow.pop %v699
      %v701 = vmul.f32 %v632, 1.442695
      %v702 = vpow.pop %v701
      %v703 = vmul.f32 %v633, 1.442695
      %v704 = vpow.pop %v703
      %v705 = vmul.f32 %v634, 1.442695
      %v706 = vpow.pop %v705
      %v707 = vmul.f32 %v635, 1.442695
      %v708 = vpow.pop %v707
      %v709 = vmul.f32 %v636, 1.442695
      %v710 = vpow.pop %v709
      %v711 = vmul.f32 %v637, 1.442695
      %v712 = vpow.pop %v711
      %v713 = vmul.f32 %v638, 1.442695
      %v714 = vpow.pop %v713
      %v715 = vmul.f32 %v639, 1.442695
      %v716 = vpow.pop %v715
      %v717 = vmul.f32 %v640, 1.442695
      %v718 = vpow.pop %v717
      %v719 = vmul.f32 %v641, 1.442695
      %v720 = vpow.pop %v719
      %v721 = vmul.f32 %v642, 1.442695
      %v722 = vpow.pop %v721
      %v723 = vmul.f32 %v643, 1.442695
      %v724 = vpow.pop %v723
      %v725 = vmul.f32 %v644, 1.442695
      %v726 = vpow.pop %v725
      %v727 = vmul.f32 %v645, 1.442695
      %v728 = vpow.pop %v727
      %v729 = vmul.f32 %v646, 1.442695
      %v730 = vpow.pop %v729
      %v731 = vmul.f32 %v647, 1.442695
      %v732 = vpow.pop %v731
      %v733 = vmul.f32 %v648, 1.442695
      %v734 = vpow.pop %v733
      %v735 = vmul.f32 %v649, 1.442695
      %v736 = vpow.pop %v735
      %v737 = vmul.f32 %v650, 1.442695
      %v738 = vpow.pop %v737
      %v739 = vmul.f32 %v651, 1.442695
      %v740 = vpow.pop %v739
      %v741 = vmul.f32 %v652, 1.442695
      %v742 = vpow.pop %v741
      %v743 = vmul.f32 %v653, 1.442695
      %v744 = vpow.pop %v743
      %v745 = vmul.f32 %v654, 1.442695
      %v746 = vpow.pop %v745
      %v747 = vmul.f32 %v655, 1.442695
      %v748 = vpow.pop %v747
      %v749 = vmul.f32 %v656, 1.442695
      %v750 = vpow.pop %v749
      %v751 = vmul.f32 %v657, 1.442695
      %v752 = vpow.pop %v751
      %v753 = vmul.f32 %v658, 1.442695
      %v754 = vpow.pop %v753
      %v755 = vmul.f32 %v659, 1.442695
      %v756 = vpow.pop %v755
      %v757 = vmul.f32 %v660, 1.442695
      %v758 = vpow.pop %v757
      %v759 = vmul.f32 %v661, 1.442695
      %v760 = vpow.pop %v759
      %v761 = vmul.f32 %v662, 1.442695
      %v762 = vpow.pop %v761
      %v763 = vmul.f32 %v663, 1.442695
      %v764 = vpow.pop %v763
      %v765 = vmul.f32 %v664, 1.442695
      %v766 = vpow.pop %v765
      %v767 = vmul.f32 %v665, 1.442695
      %v768 = vpow.pop %v767
      %v769 = vmul.f32 %v666, 1.442695
      %v770 = vpow.pop %v769
      %v771 = vmul.f32 %v667, 1.442695
      %v772 = vpow.pop %v771
      %v773 = vmul.f32 %v668, 1.442695
      %v774 = vpow.pop %v773
      %v775 = vmul.f32 %v669, 1.442695
      %v776 = vpow.pop %v775
      %v777 = vmul.f32 %v670, 1.442695
      %v778 = vpow.pop %v777
      %v779 = vmul.f32 %v671, 1.442695
      %v780 = vpow.pop %v779
      %v781 = vmul.f32 %v672, 1.442695
      %v782 = vpow.pop %v781
      %v783 = vmul.f32 %v673, 1.442695
      %v784 = vpow.pop %v783
      %v785 = vmul.f32 %v674, 1.442695
      %v786 = vpow.pop %v785
      %v787 = vmul.f32 %v675, 1.442695
      %v788 = vpow.pop %v787
      %v789 = vmul.f32 %v676, 1.442695
      %v790 = vpow.pop %v789
      %v791 = vmul.f32 %v677, 1.442695
      %v792 = vpow.pop %v791
      %v793 = vmul.f32 %v678, 1.442695
      %v794 = vpow.pop %v793
      %v795 = vmul.f32 %v679, 1.442695
      %v796 = vpow.pop %v795
      %v797 = vmul.f32 %v680, 1.442695
      %v798 = vpow.pop %v797
      %v799 = vmul.f32 %v681, 1.442695
      %v800 = vpow.pop %v799
      %v801 = vmul.f32 %v682, 1.442695
      %v802 = vpow.pop %v801
      %v803 = vmul.f32 %v683, 1.442695
      %v804 = vpow.pop %v803
      %v805 = vmul.f32 %v684, 1.442695
      %v806 = vpow.pop %v805
      %v807 = vmul.f32 %v685, 1.442695
      %v808 = vpow.pop %v807
      %v809 = vmul.f32 %v686, 1.442695
      %v810 = vpow.pop %v809
      %v811 = vmul.f32 %v687, 1.442695
      %v812 = vpow.pop %v811
      %v813 = vmul.f32 %v688, 1.442695
      %v814 = vpow.pop %v813
      %v815 = vmul.f32 %v689, 1.442695
      %v816 = vpow.pop %v815
      %v817 = vmul.f32 %v690, 1.442695
      %v818 = vpow.pop %v817
      %v819 = vsel %vm493, %v692, 0.0
      %v820 = vsel %vm493, %v694, 0.0
      %v821 = vadd.f32 %v819, %v820
      %v822 = vsel %vm493, %v696, 0.0
      %v823 = vadd.f32 %v821, %v822
      %v824 = vsel %vm493, %v698, 0.0
      %v825 = vadd.f32 %v823, %v824
      %v826 = vsel %vm493, %v700, 0.0
      %v827 = vadd.f32 %v825, %v826
      %v828 = vsel %vm493, %v702, 0.0
      %v829 = vadd.f32 %v827, %v828
      %v830 = vsel %vm493, %v704, 0.0
      %v831 = vadd.f32 %v829, %v830
      %v832 = vsel %vm493, %v706, 0.0
      %v833 = vadd.f32 %v831, %v832
      %v834 = vsel %vm493, %v708, 0.0
      %v835 = vadd.f32 %v833, %v834
      %v836 = vsel %vm493, %v710, 0.0
      %v837 = vadd.f32 %v835, %v836
      %v838 = vsel %vm493, %v712, 0.0
      %v839 = vadd.f32 %v837, %v838
      %v840 = vsel %vm493, %v714, 0.0
      %v841 = vadd.f32 %v839, %v840
      %v842 = vsel %vm493, %v716, 0.0
      %v843 = vadd.f32 %v841, %v842
      %v844 = vsel %vm493, %v718, 0.0
      %v845 = vadd.f32 %v843, %v844
      %v846 = vsel %vm493, %v720, 0.0
      %v847 = vadd.f32 %v845, %v846
      %v848 = vsel %vm493, %v722, 0.0
      %v849 = vadd.f32 %v847, %v848
      %v850 = vsel %vm493, %v724, 0.0
      %v851 = vadd.f32 %v849, %v850
      %v852 = vsel %vm493, %v726, 0.0
      %v853 = vadd.f32 %v851, %v852
      %v854 = vsel %vm493, %v728, 0.0
      %v855 = vadd.f32 %v853, %v854
      %v856 = vsel %vm493, %v730, 0.0
      %v857 = vadd.f32 %v855, %v856
      %v858 = vsel %vm493, %v732, 0.0
      %v859 = vadd.f32 %v857, %v858
      %v860 = vsel %vm493, %v734, 0.0
      %v861 = vadd.f32 %v859, %v860
      %v862 = vsel %vm493, %v736, 0.0
      %v863 = vadd.f32 %v861, %v862
      %v864 = vsel %vm493, %v738, 0.0
      %v865 = vadd.f32 %v863, %v864
      %v866 = vsel %vm493, %v740, 0.0
      %v867 = vadd.f32 %v865, %v866
      %v868 = vsel %vm493, %v742, 0.0
      %v869 = vadd.f32 %v867, %v868
      %v870 = vsel %vm493, %v744, 0.0
      %v871 = vadd.f32 %v869, %v870
      %v872 = vsel %vm493, %v746, 0.0
      %v873 = vadd.f32 %v871, %v872
      %v874 = vsel %vm493, %v748, 0.0
      %v875 = vadd.f32 %v873, %v874
      %v876 = vsel %vm493, %v750, 0.0
      %v877 = vadd.f32 %v875, %v876
      %v878 = vsel %vm493, %v752, 0.0
      %v879 = vadd.f32 %v877, %v878
      %v880 = vsel %vm493, %v754, 0.0
      %v881 = vadd.f32 %v879, %v880
      %v882 = vsel %vm493, %v756, 0.0
      %v883 = vadd.f32 %v881, %v882
      %v884 = vsel %vm493, %v758, 0.0
      %v885 = vadd.f32 %v883, %v884
      %v886 = vsel %vm493, %v760, 0.0
      %v887 = vadd.f32 %v885, %v886
      %v888 = vsel %vm493, %v762, 0.0
      %v889 = vadd.f32 %v887, %v888
      %v890 = vsel %vm493, %v764, 0.0
      %v891 = vadd.f32 %v889, %v890
      %v892 = vsel %vm493, %v766, 0.0
      %v893 = vadd.f32 %v891, %v892
      %v894 = vsel %vm493, %v768, 0.0
      %v895 = vadd.f32 %v893, %v894
      %v896 = vsel %vm493, %v770, 0.0
      %v897 = vadd.f32 %v895, %v896
      %v898 = vsel %vm493, %v772, 0.0
      %v899 = vadd.f32 %v897, %v898
      %v900 = vsel %vm493, %v774, 0.0
      %v901 = vadd.f32 %v899, %v900
      %v902 = vsel %vm493, %v776, 0.0
      %v903 = vadd.f32 %v901, %v902
      %v904 = vsel %vm493, %v778, 0.0
      %v905 = vadd.f32 %v903, %v904
      %v906 = vsel %vm493, %v780, 0.0
      %v907 = vadd.f32 %v905, %v906
      %v908 = vsel %vm493, %v782, 0.0
      %v909 = vadd.f32 %v907, %v908
      %v910 = vsel %vm493, %v784, 0.0
      %v911 = vadd.f32 %v909, %v910
      %v912 = vsel %vm493, %v786, 0.0
      %v913 = vadd.f32 %v911, %v912
      %v914 = vsel %vm493, %v788, 0.0
      %v915 = vadd.f32 %v913, %v914
      %v916 = vsel %vm493, %v790, 0.0
      %v917 = vadd.f32 %v915, %v916
      %v918 = vsel %vm493, %v792, 0.0
      %v919 = vadd.f32 %v917, %v918
      %v920 = vsel %vm493, %v794, 0.0
      %v921 = vadd.f32 %v919, %v920
      %v922 = vsel %vm493, %v796, 0.0
      %v923 = vadd.f32 %v921, %v922
      %v924 = vsel %vm493, %v798, 0.0
      %v925 = vadd.f32 %v923, %v924
      %v926 = vsel %vm493, %v800, 0.0
      %v927 = vadd.f32 %v925, %v926
      %v928 = vsel %vm493, %v802, 0.0
      %v929 = vadd.f32 %v927, %v928
      %v930 = vsel %vm493, %v804, 0.0
      %v931 = vadd.f32 %v929, %v930
      %v932 = vsel %vm493, %v806, 0.0
      %v933 = vadd.f32 %v931, %v932
      %v934 = vsel %vm493, %v808, 0.0
      %v935 = vadd.f32 %v933, %v934
      %v936 = vsel %vm493, %v810, 0.0
      %v937 = vadd.f32 %v935, %v936
      %v938 = vsel %vm493, %v812, 0.0
      %v939 = vadd.f32 %v937, %v938
      %v940 = vsel %vm493, %v814, 0.0
      %v941 = vadd.f32 %v939, %v940
      %v942 = vsel %vm493, %v816, 0.0
      %v943 = vadd.f32 %v941, %v942
      %v944 = vsel %vm493, %v818, 0.0
      %v945 = vadd.f32 %v943, %v944
      %v946 = vrot.slane %v945, 4
      %v947 = vadd.f32 %v945, %v946
      %v948 = vrot.slane %v947, 2
      %v949 = vadd.f32 %v947, %v948
      %v950 = vrot.slane %v949, 1
      %v951 = vadd.f32 %v949, %v950
      %v952 = vrcp.pop %v951
      %v953 = vmul.f32 %v951, %v952
      %v954 = vsub.f32 1.0, %v953
      %v955 = vmul.f32 %v952, %v954
      %v956 = vadd.f32 %v952, %v955
      %vm957 = vweird.f32 %v951
      %vm958 = vweird.f32 %v952
      %vm959 = vmor %vm957, %vm958
      %v960 = vsel %vm959, %v952, %v956
      %v961 = vand.u32 2147483647, %v951
      %vm962 = vcmp.eq.f32.partialorder %v961, 8.507059e+37
      %v963 = vand.u32 %v951, 2147483648
      %v964 = vor.u32 1.1754944e-38, %v963
      %v965 = vsel %vm962, %v964, %v960
      %v966 = vmul.f32 %v692, %v965
      %v967 = vmul.f32 %v694, %v965
      %v968 = vmul.f32 %v696, %v965
      %v969 = vmul.f32 %v698, %v965
      %v970 = vmul.f32 %v700, %v965
      %v971 = vmul.f32 %v702, %v965
      %v972 = vmul.f32 %v704, %v965
      %v973 = vmul.f32 %v706, %v965
      %v974 = vmul.f32 %v708, %v965
      %v975 = vmul.f32 %v710, %v965
      %v976 = vmul.f32 %v712, %v965
      %v977 = vmul.f32 %v714, %v965
      %v978 = vmul.f32 %v716, %v965
      %v979 = vmul.f32 %v718, %v965
      %v980 = vmul.f32 %v720, %v965
      %v981 = vmul.f32 %v722, %v965
      %v982 = vmul.f32 %v724, %v965
      %v983 = vmul.f32 %v726, %v965
      %v984 = vmul.f32 %v728, %v965
      %v985 = vmul.f32 %v730, %v965
      %v986 = vmul.f32 %v732, %v965
      %v987 = vmul.f32 %v734, %v965
      %v988 = vmul.f32 %v736, %v965
      %v989 = vmul.f32 %v738, %v965
      %v990 = vmul.f32 %v740, %v965
      %v991 = vmul.f32 %v742, %v965
      %v992 = vmul.f32 %v744, %v965
      %v993 = vmul.f32 %v746, %v965
      %v994 = vmul.f32 %v748, %v965
      %v995 = vmul.f32 %v750, %v965
      %v996 = vmul.f32 %v752, %v965
      %v997 = vmul.f32 %v754, %v965
      %v998 = vmul.f32 %v756, %v965
      %v999 = vmul.f32 %v758, %v965
      %v1000 = vmul.f32 %v760, %v965
      %v1001 = vmul.f32 %v762, %v965
      %v1002 = vmul.f32 %v764, %v965
      %v1003 = vmul.f32 %v766, %v965
      %v1004 = vmul.f32 %v768, %v965
      %v1005 = vmul.f32 %v770, %v965
      %v1006 = vmul.f32 %v772, %v965
      %v1007 = vmul.f32 %v774, %v965
      %v1008 = vmul.f32 %v776, %v965
      %v1009 = vmul.f32 %v778, %v965
      %v1010 = vmul.f32 %v780, %v965
      %v1011 = vmul.f32 %v782, %v965
      %v1012 = vmul.f32 %v784, %v965
      %v1013 = vmul.f32 %v786, %v965
      %v1014 = vmul.f32 %v788, %v965
      %v1015 = vmul.f32 %v790, %v965
      %v1016 = vmul.f32 %v792, %v965
      %v1017 = vmul.f32 %v794, %v965
      %v1018 = vmul.f32 %v796, %v965
      %v1019 = vmul.f32 %v798, %v965
      %v1020 = vmul.f32 %v800, %v965
      %v1021 = vmul.f32 %v802, %v965
      %v1022 = vmul.f32 %v804, %v965
      %v1023 = vmul.f32 %v806, %v965
      %v1024 = vmul.f32 %v808, %v965
      %v1025 = vmul.f32 %v810, %v965
      %v1026 = vmul.f32 %v812, %v965
      %v1027 = vmul.f32 %v814, %v965
      %v1028 = vmul.f32 %v816, %v965
      %v1029 = vmul.f32 %v818, %v965
      %1030 = vst.msk [vmem:[#allocation2] sm:$0xff] %vm493, %v966
      %1031 = vst.msk [vmem:[#allocation2 + $0x8] sm:$0xff] %vm493, %v967
      %1032 = vst.msk [vmem:[#allocation2 + $0x10] sm:$0xff] %vm493, %v968
      %1033 = vst.msk [vmem:[#allocation2 + $0x18] sm:$0xff] %vm493, %v969
      %1034 = vst.msk [vmem:[#allocation2 + $0x20] sm:$0xff] %vm493, %v970
      %1035 = vst.msk [vmem:[#allocation2 + $0x28] sm:$0xff] %vm493, %v971
      %1036 = vst.msk [vmem:[#allocation2 + $0x30] sm:$0xff] %vm493, %v972
      %1037 = vst.msk [vmem:[#allocation2 + $0x38] sm:$0xff] %vm493, %v973
      %1038 = vst.msk [vmem:[#allocation2 + $0x40] sm:$0xff] %vm493, %v974
      %1039 = vst.msk [vmem:[#allocation2 + $0x48] sm:$0xff] %vm493, %v975
      %1040 = vst.msk [vmem:[#allocation2 + $0x50] sm:$0xff] %vm493, %v976
      %1041 = vst.msk [vmem:[#allocation2 + $0x58] sm:$0xff] %vm493, %v977
      %1042 = vst.msk [vmem:[#allocation2 + $0x60] sm:$0xff] %vm493, %v978
      %1043 = vst.msk [vmem:[#allocation2 + $0x68] sm:$0xff] %vm493, %v979
      %1044 = vst.msk [vmem:[#allocation2 + $0x70] sm:$0xff] %vm493, %v980
      %1045 = vst.msk [vmem:[#allocation2 + $0x78] sm:$0xff] %vm493, %v981
      %1046 = vst.msk [vmem:[#allocation2 + $0x80] sm:$0xff] %vm493, %v982
      %1047 = vst.msk [vmem:[#allocation2 + $0x88] sm:$0xff] %vm493, %v983
      %1048 = vst.msk [vmem:[#allocation2 + $0x90] sm:$0xff] %vm493, %v984
      %1049 = vst.msk [vmem:[#allocation2 + $0x98] sm:$0xff] %vm493, %v985
      %1050 = vst.msk [vmem:[#allocation2 + $0xa0] sm:$0xff] %vm493, %v986
      %1051 = vst.msk [vmem:[#allocation2 + $0xa8] sm:$0xff] %vm493, %v987
      %1052 = vst.msk [vmem:[#allocation2 + $0xb0] sm:$0xff] %vm493, %v988
      %1053 = vst.msk [vmem:[#allocation2 + $0xb8] sm:$0xff] %vm493, %v989
      %1054 = vst.msk [vmem:[#allocation2 + $0xc0] sm:$0xff] %vm493, %v990
      %1055 = vst.msk [vmem:[#allocation2 + $0xc8] sm:$0xff] %vm493, %v991
      %1056 = vst.msk [vmem:[#allocation2 + $0xd0] sm:$0xff] %vm493, %v992
      %1057 = vst.msk [vmem:[#allocation2 + $0xd8] sm:$0xff] %vm493, %v993
      %1058 = vst.msk [vmem:[#allocation2 + $0xe0] sm:$0xff] %vm493, %v994
      %1059 = vst.msk [vmem:[#allocation2 + $0xe8] sm:$0xff] %vm493, %v995
      %1060 = vst.msk [vmem:[#allocation2 + $0xf0] sm:$0xff] %vm493, %v996
      %1061 = vst.msk [vmem:[#allocation2 + $0xf8] sm:$0xff] %vm493, %v997
      %1062 = vst.msk [vmem:[#allocation2 + $0x100] sm:$0xff] %vm493, %v998
      %1063 = vst.msk [vmem:[#allocation2 + $0x108] sm:$0xff] %vm493, %v999
      %1064 = vst.msk [vmem:[#allocation2 + $0x110] sm:$0xff] %vm493, %v1000
      %1065 = vst.msk [vmem:[#allocation2 + $0x118] sm:$0xff] %vm493, %v1001
      %1066 = vst.msk [vmem:[#allocation2 + $0x120] sm:$0xff] %vm493, %v1002
      %1067 = vst.msk [vmem:[#allocation2 + $0x128] sm:$0xff] %vm493, %v1003
      %1068 = vst.msk [vmem:[#allocation2 + $0x130] sm:$0xff] %vm493, %v1004
      %1069 = vst.msk [vmem:[#allocation2 + $0x138] sm:$0xff] %vm493, %v1005
      %1070 = vst.msk [vmem:[#allocation2 + $0x140] sm:$0xff] %vm493, %v1006
      %1071 = vst.msk [vmem:[#allocation2 + $0x148] sm:$0xff] %vm493, %v1007
      %1072 = vst.msk [vmem:[#allocation2 + $0x150] sm:$0xff] %vm493, %v1008
      %1073 = vst.msk [vmem:[#allocation2 + $0x158] sm:$0xff] %vm493, %v1009
      %1074 = vst.msk [vmem:[#allocation2 + $0x160] sm:$0xff] %vm493, %v1010
      %1075 = vst.msk [vmem:[#allocation2 + $0x168] sm:$0xff] %vm493, %v1011
      %1076 = vst.msk [vmem:[#allocation2 + $0x170] sm:$0xff] %vm493, %v1012
      %1077 = vst.msk [vmem:[#allocation2 + $0x178] sm:$0xff] %vm493, %v1013
      %1078 = vst.msk [vmem:[#allocation2 + $0x180] sm:$0xff] %vm493, %v1014
      %1079 = vst.msk [vmem:[#allocation2 + $0x188] sm:$0xff] %vm493, %v1015
      %1080 = vst.msk [vmem:[#allocation2 + $0x190] sm:$0xff] %vm493, %v1016
      %1081 = vst.msk [vmem:[#allocation2 + $0x198] sm:$0xff] %vm493, %v1017
      %1082 = vst.msk [vmem:[#allocation2 + $0x1a0] sm:$0xff] %vm493, %v1018
      %1083 = vst.msk [vmem:[#allocation2 + $0x1a8] sm:$0xff] %vm493, %v1019
      %1084 = vst.msk [vmem:[#allocation2 + $0x1b0] sm:$0xff] %vm493, %v1020
      %1085 = vst.msk [vmem:[#allocation2 + $0x1b8] sm:$0xff] %vm493, %v1021
      %1086 = vst.msk [vmem:[#allocation2 + $0x1c0] sm:$0xff] %vm493, %v1022
      %1087 = vst.msk [vmem:[#allocation2 + $0x1c8] sm:$0xff] %vm493, %v1023
      %1088 = vst.msk [vmem:[#allocation2 + $0x1d0] sm:$0xff] %vm493, %v1024
      %1089 = vst.msk [vmem:[#allocation2 + $0x1d8] sm:$0xff] %vm493, %v1025
      %1090 = vst.msk [vmem:[#allocation2 + $0x1e0] sm:$0xff] %vm493, %v1026
      %1091 = vst.msk [vmem:[#allocation2 + $0x1e8] sm:$0xff] %vm493, %v1027
      %1092 = vst.msk [vmem:[#allocation2 + $0x1f0] sm:$0xff] %vm493, %v1028
      %1093 = vst.msk [vmem:[#allocation2 + $0x1f8] sm:$0xff] %vm493, %v1029
    $region17: #{tpu_custom_call.1} parent=1 // pred_fallthru
      _
    %v1094 = vld [vmem:[#allocation2] sm:$0xff]
    %v1095 = vld [vmem:[#allocation2 + $0x8] sm:$0xff]
    %v1096 = vld [vmem:[#allocation2 + $0x10] sm:$0xff]
    %v1097 = vld [vmem:[#allocation2 + $0x18] sm:$0xff]
    %v1098 = vld [vmem:[#allocation2 + $0x20] sm:$0xff]
    %v1099 = vld [vmem:[#allocation2 + $0x28] sm:$0xff]
    %v1100 = vld [vmem:[#allocation2 + $0x30] sm:$0xff]
    %v1101 = vld [vmem:[#allocation2 + $0x38] sm:$0xff]
    %v1102 = vld [vmem:[#allocation2 + $0x40] sm:$0xff]
    %v1103 = vld [vmem:[#allocation2 + $0x48] sm:$0xff]
    %v1104 = vld [vmem:[#allocation2 + $0x50] sm:$0xff]
    %v1105 = vld [vmem:[#allocation2 + $0x58] sm:$0xff]
    %v1106 = vld [vmem:[#allocation2 + $0x60] sm:$0xff]
    %v1107 = vld [vmem:[#allocation2 + $0x68] sm:$0xff]
    %v1108 = vld [vmem:[#allocation2 + $0x70] sm:$0xff]
    %v1109 = vld [vmem:[#allocation2 + $0x78] sm:$0xff]
    %v1110 = vld [vmem:[#allocation2 + $0x80] sm:$0xff]
    %v1111 = vld [vmem:[#allocation2 + $0x88] sm:$0xff]
    %v1112 = vld [vmem:[#allocation2 + $0x90] sm:$0xff]
    %v1113 = vld [vmem:[#allocation2 + $0x98] sm:$0xff]
    %v1114 = vld [vmem:[#allocation2 + $0xa0] sm:$0xff]
    %v1115 = vld [vmem:[#allocation2 + $0xa8] sm:$0xff]
    %v1116 = vld [vmem:[#allocation2 + $0xb0] sm:$0xff]
    %v1117 = vld [vmem:[#allocation2 + $0xb8] sm:$0xff]
    %v1118 = vld [vmem:[#allocation2 + $0xc0] sm:$0xff]
    %v1119 = vld [vmem:[#allocation2 + $0xc8] sm:$0xff]
    %v1120 = vld [vmem:[#allocation2 + $0xd0] sm:$0xff]
    %v1121 = vld [vmem:[#allocation2 + $0xd8] sm:$0xff]
    %v1122 = vld [vmem:[#allocation2 + $0xe0] sm:$0xff]
    %v1123 = vld [vmem:[#allocation2 + $0xe8] sm:$0xff]
    %v1124 = vld [vmem:[#allocation2 + $0xf0] sm:$0xff]
    %v1125 = vld [vmem:[#allocation2 + $0xf8] sm:$0xff]
    %v1126 = vld [vmem:[#allocation2 + $0x100] sm:$0xff]
    %v1127 = vld [vmem:[#allocation2 + $0x108] sm:$0xff]
    %v1128 = vld [vmem:[#allocation2 + $0x110] sm:$0xff]
    %v1129 = vld [vmem:[#allocation2 + $0x118] sm:$0xff]
    %v1130 = vld [vmem:[#allocation2 + $0x120] sm:$0xff]
    %v1131 = vld [vmem:[#allocation2 + $0x128] sm:$0xff]
    %v1132 = vld [vmem:[#allocation2 + $0x130] sm:$0xff]
    %v1133 = vld [vmem:[#allocation2 + $0x138] sm:$0xff]
    %v1134 = vld [vmem:[#allocation2 + $0x140] sm:$0xff]
    %v1135 = vld [vmem:[#allocation2 + $0x148] sm:$0xff]
    %v1136 = vld [vmem:[#allocation2 + $0x150] sm:$0xff]
    %v1137 = vld [vmem:[#allocation2 + $0x158] sm:$0xff]
    %v1138 = vld [vmem:[#allocation2 + $0x160] sm:$0xff]
    %v1139 = vld [vmem:[#allocation2 + $0x168] sm:$0xff]
    %v1140 = vld [vmem:[#allocation2 + $0x170] sm:$0xff]
    %v1141 = vld [vmem:[#allocation2 + $0x178] sm:$0xff]
    %v1142 = vld [vmem:[#allocation2 + $0x180] sm:$0xff]
    %v1143 = vld [vmem:[#allocation2 + $0x188] sm:$0xff]
    %v1144 = vld [vmem:[#allocation2 + $0x190] sm:$0xff]
    %v1145 = vld [vmem:[#allocation2 + $0x198] sm:$0xff]
    %v1146 = vld [vmem:[#allocation2 + $0x1a0] sm:$0xff]
    %v1147 = vld [vmem:[#allocation2 + $0x1a8] sm:$0xff]
    %v1148 = vld [vmem:[#allocation2 + $0x1b0] sm:$0xff]
    %v1149 = vld [vmem:[#allocation2 + $0x1b8] sm:$0xff]
    %v1150 = vld [vmem:[#allocation2 + $0x1c0] sm:$0xff]
    %v1151 = vld [vmem:[#allocation2 + $0x1c8] sm:$0xff]
    %v1152 = vld [vmem:[#allocation2 + $0x1d0] sm:$0xff]
    %v1153 = vld [vmem:[#allocation2 + $0x1d8] sm:$0xff]
    %v1154 = vld [vmem:[#allocation2 + $0x1e0] sm:$0xff]
    %v1155 = vld [vmem:[#allocation2 + $0x1e8] sm:$0xff]
    %v1156 = vld [vmem:[#allocation2 + $0x1f0] sm:$0xff]
    %v1157 = vld [vmem:[#allocation2 + $0x1f8] sm:$0xff]
    %v1158 = vld [vmem:[%s2] sm:$0xff]
    %v1159 = vld [vmem:[%s2 + $0x8] sm:$0xff]
    %v1160 = vld [vmem:[%s2 + $0x10] sm:$0xff]
    %v1161 = vld [vmem:[%s2 + $0x18] sm:$0xff]
    %vm1162 = vcmask 130048
    %v1164 = vsel %vm1162, %v1094, 0
    %v1167 = vsel %vm1162, %v1095, 0
    %v1170 = vsel %vm1162, %v1096, 0
    %v1173 = vsel %vm1162, %v1097, 0
    %v1176 = vsel %vm1162, %v1098, 0
    %v1179 = vsel %vm1162, %v1099, 0
    %v1182 = vsel %vm1162, %v1100, 0
    %v1185 = vsel %vm1162, %v1101, 0
    %v1188 = vsel %vm1162, %v1102, 0
    %v1191 = vsel %vm1162, %v1103, 0
    %v1194 = vsel %vm1162, %v1104, 0
    %v1197 = vsel %vm1162, %v1105, 0
    %v1200 = vsel %vm1162, %v1106, 0
    %v1203 = vsel %vm1162, %v1107, 0
    %v1206 = vsel %vm1162, %v1108, 0
    %v1209 = vsel %vm1162, %v1109, 0
    %v1212 = vsel %vm1162, %v1110, 0
    %v1215 = vsel %vm1162, %v1111, 0
    %v1218 = vsel %vm1162, %v1112, 0
    %v1221 = vsel %vm1162, %v1113, 0
    %v1224 = vsel %vm1162, %v1114, 0
    %v1227 = vsel %vm1162, %v1115, 0
    %v1230 = vsel %vm1162, %v1116, 0
    %v1233 = vsel %vm1162, %v1117, 0
    %v1236 = vsel %vm1162, %v1118, 0
    %v1239 = vsel %vm1162, %v1119, 0
    %v1242 = vsel %vm1162, %v1120, 0
    %v1245 = vsel %vm1162, %v1121, 0
    %v1248 = vsel %vm1162, %v1122, 0
    %v1251 = vsel %vm1162, %v1123, 0
    %v1254 = vsel %vm1162, %v1124, 0
    %v1257 = vsel %vm1162, %v1125, 0
    %v1260 = vsel %vm1162, %v1126, 0
    %v1263 = vsel %vm1162, %v1127, 0
    %v1266 = vsel %vm1162, %v1128, 0
    %v1269 = vsel %vm1162, %v1129, 0
    %v1272 = vsel %vm1162, %v1130, 0
    %v1275 = vsel %vm1162, %v1131, 0
    %v1278 = vsel %vm1162, %v1132, 0
    %v1281 = vsel %vm1162, %v1133, 0
    %v1284 = vsel %vm1162, %v1134, 0
    %v1287 = vsel %vm1162, %v1135, 0
    %v1290 = vsel %vm1162, %v1136, 0
    %v1293 = vsel %vm1162, %v1137, 0
    %v1296 = vsel %vm1162, %v1138, 0
    %v1299 = vsel %vm1162, %v1139, 0
    %v1302 = vsel %vm1162, %v1140, 0
    %v1305 = vsel %vm1162, %v1141, 0
    %v1308 = vsel %vm1162, %v1142, 0
    %v1311 = vsel %vm1162, %v1143, 0
    %v1314 = vsel %vm1162, %v1144, 0
    %v1317 = vsel %vm1162, %v1145, 0
    %v1320 = vsel %vm1162, %v1146, 0
    %v1323 = vsel %vm1162, %v1147, 0
    %v1326 = vsel %vm1162, %v1148, 0
    %v1329 = vsel %vm1162, %v1149, 0
    %v1332 = vsel %vm1162, %v1150, 0
    %v1335 = vsel %vm1162, %v1151, 0
    %v1338 = vsel %vm1162, %v1152, 0
    %v1341 = vsel %vm1162, %v1153, 0
    %v1344 = vsel %vm1162, %v1154, 0
    %v1347 = vsel %vm1162, %v1155, 0
    %v1350 = vsel %vm1162, %v1156, 0
    %v1353 = vsel %vm1162, %v1157, 0
    %1355 = vmatpush.msra.mxu0 0.0
    %1356 = vmatpush.msra.mxu0 0.0
    %1357 = vmatpush.msra.mxu0 0.0
    %1358 = vmatpush.msra.mxu0 0.0
    %1359 = vmatpush.msra.mxu0 0.0
    %1360 = vmatpush.msra.mxu0 0.0
    %1361 = vmatpush.msra.mxu0 0.0
    %1362 = vmatpush.msra.mxu0 0.0
    %1363 = vmatpush.msra.mxu0 0.0
    %1364 = vmatpush.msra.mxu0 0.0
    %1365 = vmatpush.msra.mxu0 0.0
    %1366 = vmatpush.msra.mxu0 0.0
    %1367 = vmatpush.msra.mxu0 0.0
    %1368 = vmatpush.msra.mxu0 0.0
    %1369 = vmatpush.msra.mxu0 %v1160
    %1370 = vmatpush.msra.mxu0 %v1158
    %1371 = vmatmul.f32.gmra.mxu0 %v1164
    %v1372 = vpop.f32.mrf.mxu0
    %v1373 = vadd.f32 0.0, %v1372
    %1374 = vmatmul.f32.gmra.mxu0 %v1167
    %v1375 = vpop.f32.mrf.mxu0
    %v1376 = vadd.f32 0.0, %v1375
    %1377 = vmatmul.f32.gmra.mxu0 %v1170
    %v1378 = vpop.f32.mrf.mxu0
    %v1379 = vadd.f32 0.0, %v1378
    %1380 = vmatmul.f32.gmra.mxu0 %v1173
    %v1381 = vpop.f32.mrf.mxu0
    %v1382 = vadd.f32 0.0, %v1381
    %1383 = vmatmul.f32.gmra.mxu0 %v1176
    %v1384 = vpop.f32.mrf.mxu0
    %v1385 = vadd.f32 0.0, %v1384
    %1386 = vmatmul.f32.gmra.mxu0 %v1179
    %v1387 = vpop.f32.mrf.mxu0
    %v1388 = vadd.f32 0.0, %v1387
    %1389 = vmatmul.f32.gmra.mxu0 %v1182
    %v1390 = vpop.f32.mrf.mxu0
    %v1391 = vadd.f32 0.0, %v1390
    %1392 = vmatmul.f32.gmra.mxu0 %v1185
    %v1393 = vpop.f32.mrf.mxu0
    %v1394 = vadd.f32 0.0, %v1393
    %1395 = vmatmul.f32.gmra.mxu0 %v1188
    %v1396 = vpop.f32.mrf.mxu0
    %v1397 = vadd.f32 0.0, %v1396
    %1398 = vmatmul.f32.gmra.mxu0 %v1191
    %v1399 = vpop.f32.mrf.mxu0
    %v1400 = vadd.f32 0.0, %v1399
    %1401 = vmatmul.f32.gmra.mxu0 %v1194
    %v1402 = vpop.f32.mrf.mxu0
    %v1403 = vadd.f32 0.0, %v1402
    %1404 = vmatmul.f32.gmra.mxu0 %v1197
    %v1405 = vpop.f32.mrf.mxu0
    %v1406 = vadd.f32 0.0, %v1405
    %1407 = vmatmul.f32.gmra.mxu0 %v1200
    %v1408 = vpop.f32.mrf.mxu0
    %v1409 = vadd.f32 0.0, %v1408
    %1410 = vmatmul.f32.gmra.mxu0 %v1203
    %v1411 = vpop.f32.mrf.mxu0
    %v1412 = vadd.f32 0.0, %v1411
    %1413 = vmatmul.f32.gmra.mxu0 %v1206
    %v1414 = vpop.f32.mrf.mxu0
    %v1415 = vadd.f32 0.0, %v1414
    %1416 = vmatmul.f32.gmra.mxu0 %v1209
    %v1417 = vpop.f32.mrf.mxu0
    %v1418 = vadd.f32 0.0, %v1417
    %1419 = vmatmul.f32.gmra.mxu0 %v1212
    %v1420 = vpop.f32.mrf.mxu0
    %v1421 = vadd.f32 0.0, %v1420
    %1422 = vmatmul.f32.gmra.mxu0 %v1215
    %v1423 = vpop.f32.mrf.mxu0
    %v1424 = vadd.f32 0.0, %v1423
    %1425 = vmatmul.f32.gmra.mxu0 %v1218
    %v1426 = vpop.f32.mrf.mxu0
    %v1427 = vadd.f32 0.0, %v1426
    %1428 = vmatmul.f32.gmra.mxu0 %v1221
    %v1429 = vpop.f32.mrf.mxu0
    %v1430 = vadd.f32 0.0, %v1429
    %1431 = vmatmul.f32.gmra.mxu0 %v1224
    %v1432 = vpop.f32.mrf.mxu0
    %v1433 = vadd.f32 0.0, %v1432
    %1434 = vmatmul.f32.gmra.mxu0 %v1227
    %v1435 = vpop.f32.mrf.mxu0
    %v1436 = vadd.f32 0.0, %v1435
    %1437 = vmatmul.f32.gmra.mxu0 %v1230
    %v1438 = vpop.f32.mrf.mxu0
    %v1439 = vadd.f32 0.0, %v1438
    %1440 = vmatmul.f32.gmra.mxu0 %v1233
    %v1441 = vpop.f32.mrf.mxu0
    %v1442 = vadd.f32 0.0, %v1441
    %1443 = vmatmul.f32.gmra.mxu0 %v1236
    %v1444 = vpop.f32.mrf.mxu0
    %v1445 = vadd.f32 0.0, %v1444
    %1446 = vmatmul.f32.gmra.mxu0 %v1239
    %v1447 = vpop.f32.mrf.mxu0
    %v1448 = vadd.f32 0.0, %v1447
    %1449 = vmatmul.f32.gmra.mxu0 %v1242
    %v1450 = vpop.f32.mrf.mxu0
    %v1451 = vadd.f32 0.0, %v1450
    %1452 = vmatmul.f32.gmra.mxu0 %v1245
    %v1453 = vpop.f32.mrf.mxu0
    %v1454 = vadd.f32 0.0, %v1453
    %1455 = vmatmul.f32.gmra.mxu0 %v1248
    %v1456 = vpop.f32.mrf.mxu0
    %v1457 = vadd.f32 0.0, %v1456
    %1458 = vmatmul.f32.gmra.mxu0 %v1251
    %v1459 = vpop.f32.mrf.mxu0
    %v1460 = vadd.f32 0.0, %v1459
    %1461 = vmatmul.f32.gmra.mxu0 %v1254
    %v1462 = vpop.f32.mrf.mxu0
    %v1463 = vadd.f32 0.0, %v1462
    %1464 = vmatmul.f32.gmra.mxu0 %v1257
    %v1465 = vpop.f32.mrf.mxu0
    %v1466 = vadd.f32 0.0, %v1465
    %1467 = vmatmul.f32.gmra.mxu0 %v1260
    %v1468 = vpop.f32.mrf.mxu0
    %v1469 = vadd.f32 0.0, %v1468
    %1470 = vmatmul.f32.gmra.mxu0 %v1263
    %v1471 = vpop.f32.mrf.mxu0
    %v1472 = vadd.f32 0.0, %v1471
    %1473 = vmatmul.f32.gmra.mxu0 %v1266
    %v1474 = vpop.f32.mrf.mxu0
    %v1475 = vadd.f32 0.0, %v1474
    %1476 = vmatmul.f32.gmra.mxu0 %v1269
    %v1477 = vpop.f32.mrf.mxu0
    %v1478 = vadd.f32 0.0, %v1477
    %1479 = vmatmul.f32.gmra.mxu0 %v1272
    %v1480 = vpop.f32.mrf.mxu0
    %v1481 = vadd.f32 0.0, %v1480
    %1482 = vmatmul.f32.gmra.mxu0 %v1275
    %v1483 = vpop.f32.mrf.mxu0
    %v1484 = vadd.f32 0.0, %v1483
    %1485 = vmatmul.f32.gmra.mxu0 %v1278
    %v1486 = vpop.f32.mrf.mxu0
    %v1487 = vadd.f32 0.0, %v1486
    %1488 = vmatmul.f32.gmra.mxu0 %v1281
    %v1489 = vpop.f32.mrf.mxu0
    %v1490 = vadd.f32 0.0, %v1489
    %1491 = vmatmul.f32.gmra.mxu0 %v1284
    %v1492 = vpop.f32.mrf.mxu0
    %v1493 = vadd.f32 0.0, %v1492
    %1494 = vmatmul.f32.gmra.mxu0 %v1287
    %v1495 = vpop.f32.mrf.mxu0
    %v1496 = vadd.f32 0.0, %v1495
    %1497 = vmatmul.f32.gmra.mxu0 %v1290
    %v1498 = vpop.f32.mrf.mxu0
    %v1499 = vadd.f32 0.0, %v1498
    %1500 = vmatmul.f32.gmra.mxu0 %v1293
    %v1501 = vpop.f32.mrf.mxu0
    %v1502 = vadd.f32 0.0, %v1501
    %1503 = vmatmul.f32.gmra.mxu0 %v1296
    %v1504 = vpop.f32.mrf.mxu0
    %v1505 = vadd.f32 0.0, %v1504
    %1506 = vmatmul.f32.gmra.mxu0 %v1299
    %v1507 = vpop.f32.mrf.mxu0
    %v1508 = vadd.f32 0.0, %v1507
    %1509 = vmatmul.f32.gmra.mxu0 %v1302
    %v1510 = vpop.f32.mrf.mxu0
    %v1511 = vadd.f32 0.0, %v1510
    %1512 = vmatmul.f32.gmra.mxu0 %v1305
    %v1513 = vpop.f32.mrf.mxu0
    %v1514 = vadd.f32 0.0, %v1513
    %1515 = vmatmul.f32.gmra.mxu0 %v1308
    %v1516 = vpop.f32.mrf.mxu0
    %v1517 = vadd.f32 0.0, %v1516
    %1518 = vmatmul.f32.gmra.mxu0 %v1311
    %v1519 = vpop.f32.mrf.mxu0
    %v1520 = vadd.f32 0.0, %v1519
    %1521 = vmatmul.f32.gmra.mxu0 %v1314
    %v1522 = vpop.f32.mrf.mxu0
    %v1523 = vadd.f32 0.0, %v1522
    %1524 = vmatmul.f32.gmra.mxu0 %v1317
    %v1525 = vpop.f32.mrf.mxu0
    %v1526 = vadd.f32 0.0, %v1525
    %1527 = vmatmul.f32.gmra.mxu0 %v1320
    %v1528 = vpop.f32.mrf.mxu0
    %v1529 = vadd.f32 0.0, %v1528
    %1530 = vmatmul.f32.gmra.mxu0 %v1323
    %v1531 = vpop.f32.mrf.mxu0
    %v1532 = vadd.f32 0.0, %v1531
    %1533 = vmatmul.f32.gmra.mxu0 %v1326
    %v1534 = vpop.f32.mrf.mxu0
    %v1535 = vadd.f32 0.0, %v1534
    %1536 = vmatmul.f32.gmra.mxu0 %v1329
    %v1537 = vpop.f32.mrf.mxu0
    %v1538 = vadd.f32 0.0, %v1537
    %1539 = vmatmul.f32.gmra.mxu0 %v1332
    %v1540 = vpop.f32.mrf.mxu0
    %v1541 = vadd.f32 0.0, %v1540
    %1542 = vmatmul.f32.gmra.mxu0 %v1335
    %v1543 = vpop.f32.mrf.mxu0
    %v1544 = vadd.f32 0.0, %v1543
    %1545 = vmatmul.f32.gmra.mxu0 %v1338
    %v1546 = vpop.f32.mrf.mxu0
    %v1547 = vadd.f32 0.0, %v1546
    %1548 = vmatmul.f32.gmra.mxu0 %v1341
    %v1549 = vpop.f32.mrf.mxu0
    %v1550 = vadd.f32 0.0, %v1549
    %1551 = vmatmul.f32.gmra.mxu0 %v1344
    %v1552 = vpop.f32.mrf.mxu0
    %v1553 = vadd.f32 0.0, %v1552
    %1554 = vmatmul.f32.gmra.mxu0 %v1347
    %v1555 = vpop.f32.mrf.mxu0
    %v1556 = vadd.f32 0.0, %v1555
    %1557 = vmatmul.f32.gmra.mxu0 %v1350
    %v1558 = vpop.f32.mrf.mxu0
    %v1559 = vadd.f32 0.0, %v1558
    %1560 = vmatmul.f32.gmra.mxu0 %v1353
    %v1561 = vpop.f32.mrf.mxu0
    %v1562 = vadd.f32 0.0, %v1561
    %1563 = vdwg.mxu0
    %1564 = vmatpush.msra.mxu0 0.0
    %1565 = vmatpush.msra.mxu0 0.0
    %1566 = vmatpush.msra.mxu0 0.0
    %1567 = vmatpush.msra.mxu0 0.0
    %1568 = vmatpush.msra.mxu0 0.0
    %1569 = vmatpush.msra.mxu0 0.0
    %1570 = vmatpush.msra.mxu0 0.0
    %1571 = vmatpush.msra.mxu0 0.0
    %1572 = vmatpush.msra.mxu0 0.0
    %1573 = vmatpush.msra.mxu0 0.0
    %1574 = vmatpush.msra.mxu0 0.0
    %1575 = vmatpush.msra.mxu0 0.0
    %1576 = vmatpush.msra.mxu0 0.0
    %1577 = vmatpush.msra.mxu0 0.0
    %1578 = vmatpush.msra.mxu0 %v1161
    %1579 = vmatpush.msra.mxu0 %v1159
    %1580 = vmatmul.f32.gmra.mxu0 %v1164
    %v1581 = vpop.f32.mrf.mxu0
    %v1582 = vadd.f32 0.0, %v1581
    %1583 = vmatmul.f32.gmra.mxu0 %v1167
    %v1584 = vpop.f32.mrf.mxu0
    %v1585 = vadd.f32 0.0, %v1584
    %1586 = vmatmul.f32.gmra.mxu0 %v1170
    %v1587 = vpop.f32.mrf.mxu0
    %v1588 = vadd.f32 0.0, %v1587
    %1589 = vmatmul.f32.gmra.mxu0 %v1173
    %v1590 = vpop.f32.mrf.mxu0
    %v1591 = vadd.f32 0.0, %v1590
    %1592 = vmatmul.f32.gmra.mxu0 %v1176
    %v1593 = vpop.f32.mrf.mxu0
    %v1594 = vadd.f32 0.0, %v1593
    %1595 = vmatmul.f32.gmra.mxu0 %v1179
    %v1596 = vpop.f32.mrf.mxu0
    %v1597 = vadd.f32 0.0, %v1596
    %1598 = vmatmul.f32.gmra.mxu0 %v1182
    %v1599 = vpop.f32.mrf.mxu0
    %v1600 = vadd.f32 0.0, %v1599
    %1601 = vmatmul.f32.gmra.mxu0 %v1185
    %v1602 = vpop.f32.mrf.mxu0
    %v1603 = vadd.f32 0.0, %v1602
    %1604 = vmatmul.f32.gmra.mxu0 %v1188
    %v1605 = vpop.f32.mrf.mxu0
    %v1606 = vadd.f32 0.0, %v1605
    %1607 = vmatmul.f32.gmra.mxu0 %v1191
    %v1608 = vpop.f32.mrf.mxu0
    %v1609 = vadd.f32 0.0, %v1608
    %1610 = vmatmul.f32.gmra.mxu0 %v1194
    %v1611 = vpop.f32.mrf.mxu0
    %v1612 = vadd.f32 0.0, %v1611
    %1613 = vmatmul.f32.gmra.mxu0 %v1197
    %v1614 = vpop.f32.mrf.mxu0
    %v1615 = vadd.f32 0.0, %v1614
    %1616 = vmatmul.f32.gmra.mxu0 %v1200
    %v1617 = vpop.f32.mrf.mxu0
    %v1618 = vadd.f32 0.0, %v1617
    %1619 = vmatmul.f32.gmra.mxu0 %v1203
    %v1620 = vpop.f32.mrf.mxu0
    %v1621 = vadd.f32 0.0, %v1620
    %1622 = vmatmul.f32.gmra.mxu0 %v1206
    %v1623 = vpop.f32.mrf.mxu0
    %v1624 = vadd.f32 0.0, %v1623
    %1625 = vmatmul.f32.gmra.mxu0 %v1209
    %v1626 = vpop.f32.mrf.mxu0
    %v1627 = vadd.f32 0.0, %v1626
    %1628 = vmatmul.f32.gmra.mxu0 %v1212
    %v1629 = vpop.f32.mrf.mxu0
    %v1630 = vadd.f32 0.0, %v1629
    %1631 = vmatmul.f32.gmra.mxu0 %v1215
    %v1632 = vpop.f32.mrf.mxu0
    %v1633 = vadd.f32 0.0, %v1632
    %1634 = vmatmul.f32.gmra.mxu0 %v1218
    %v1635 = vpop.f32.mrf.mxu0
    %v1636 = vadd.f32 0.0, %v1635
    %1637 = vmatmul.f32.gmra.mxu0 %v1221
    %v1638 = vpop.f32.mrf.mxu0
    %v1639 = vadd.f32 0.0, %v1638
    %1640 = vmatmul.f32.gmra.mxu0 %v1224
    %v1641 = vpop.f32.mrf.mxu0
    %v1642 = vadd.f32 0.0, %v1641
    %1643 = vmatmul.f32.gmra.mxu0 %v1227
    %v1644 = vpop.f32.mrf.mxu0
    %v1645 = vadd.f32 0.0, %v1644
    %1646 = vmatmul.f32.gmra.mxu0 %v1230
    %v1647 = vpop.f32.mrf.mxu0
    %v1648 = vadd.f32 0.0, %v1647
    %1649 = vmatmul.f32.gmra.mxu0 %v1233
    %v1650 = vpop.f32.mrf.mxu0
    %v1651 = vadd.f32 0.0, %v1650
    %1652 = vmatmul.f32.gmra.mxu0 %v1236
    %v1653 = vpop.f32.mrf.mxu0
    %v1654 = vadd.f32 0.0, %v1653
    %1655 = vmatmul.f32.gmra.mxu0 %v1239
    %v1656 = vpop.f32.mrf.mxu0
    %v1657 = vadd.f32 0.0, %v1656
    %1658 = vmatmul.f32.gmra.mxu0 %v1242
    %v1659 = vpop.f32.mrf.mxu0
    %v1660 = vadd.f32 0.0, %v1659
    %1661 = vmatmul.f32.gmra.mxu0 %v1245
    %v1662 = vpop.f32.mrf.mxu0
    %v1663 = vadd.f32 0.0, %v1662
    %1664 = vmatmul.f32.gmra.mxu0 %v1248
    %v1665 = vpop.f32.mrf.mxu0
    %v1666 = vadd.f32 0.0, %v1665
    %1667 = vmatmul.f32.gmra.mxu0 %v1251
    %v1668 = vpop.f32.mrf.mxu0
    %v1669 = vadd.f32 0.0, %v1668
    %1670 = vmatmul.f32.gmra.mxu0 %v1254
    %v1671 = vpop.f32.mrf.mxu0
    %v1672 = vadd.f32 0.0, %v1671
    %1673 = vmatmul.f32.gmra.mxu0 %v1257
    %v1674 = vpop.f32.mrf.mxu0
    %v1675 = vadd.f32 0.0, %v1674
    %1676 = vmatmul.f32.gmra.mxu0 %v1260
    %v1677 = vpop.f32.mrf.mxu0
    %v1678 = vadd.f32 0.0, %v1677
    %1679 = vmatmul.f32.gmra.mxu0 %v1263
    %v1680 = vpop.f32.mrf.mxu0
    %v1681 = vadd.f32 0.0, %v1680
    %1682 = vmatmul.f32.gmra.mxu0 %v1266
    %v1683 = vpop.f32.mrf.mxu0
    %v1684 = vadd.f32 0.0, %v1683
    %1685 = vmatmul.f32.gmra.mxu0 %v1269
    %v1686 = vpop.f32.mrf.mxu0
    %v1687 = vadd.f32 0.0, %v1686
    %1688 = vmatmul.f32.gmra.mxu0 %v1272
    %v1689 = vpop.f32.mrf.mxu0
    %v1690 = vadd.f32 0.0, %v1689
    %1691 = vmatmul.f32.gmra.mxu0 %v1275
    %v1692 = vpop.f32.mrf.mxu0
    %v1693 = vadd.f32 0.0, %v1692
    %1694 = vmatmul.f32.gmra.mxu0 %v1278
    %v1695 = vpop.f32.mrf.mxu0
    %v1696 = vadd.f32 0.0, %v1695
    %1697 = vmatmul.f32.gmra.mxu0 %v1281
    %v1698 = vpop.f32.mrf.mxu0
    %v1699 = vadd.f32 0.0, %v1698
    %1700 = vmatmul.f32.gmra.mxu0 %v1284
    %v1701 = vpop.f32.mrf.mxu0
    %v1702 = vadd.f32 0.0, %v1701
    %1703 = vmatmul.f32.gmra.mxu0 %v1287
    %v1704 = vpop.f32.mrf.mxu0
    %v1705 = vadd.f32 0.0, %v1704
    %1706 = vmatmul.f32.gmra.mxu0 %v1290
    %v1707 = vpop.f32.mrf.mxu0
    %v1708 = vadd.f32 0.0, %v1707
    %1709 = vmatmul.f32.gmra.mxu0 %v1293
    %v1710 = vpop.f32.mrf.mxu0
    %v1711 = vadd.f32 0.0, %v1710
    %1712 = vmatmul.f32.gmra.mxu0 %v1296
    %v1713 = vpop.f32.mrf.mxu0
    %v1714 = vadd.f32 0.0, %v1713
    %1715 = vmatmul.f32.gmra.mxu0 %v1299
    %v1716 = vpop.f32.mrf.mxu0
    %v1717 = vadd.f32 0.0, %v1716
    %1718 = vmatmul.f32.gmra.mxu0 %v1302
    %v1719 = vpop.f32.mrf.mxu0
    %v1720 = vadd.f32 0.0, %v1719
    %1721 = vmatmul.f32.gmra.mxu0 %v1305
    %v1722 = vpop.f32.mrf.mxu0
    %v1723 = vadd.f32 0.0, %v1722
    %1724 = vmatmul.f32.gmra.mxu0 %v1308
    %v1725 = vpop.f32.mrf.mxu0
    %v1726 = vadd.f32 0.0, %v1725
    %1727 = vmatmul.f32.gmra.mxu0 %v1311
    %v1728 = vpop.f32.mrf.mxu0
    %v1729 = vadd.f32 0.0, %v1728
    %1730 = vmatmul.f32.gmra.mxu0 %v1314
    %v1731 = vpop.f32.mrf.mxu0
    %v1732 = vadd.f32 0.0, %v1731
    %1733 = vmatmul.f32.gmra.mxu0 %v1317
    %v1734 = vpop.f32.mrf.mxu0
    %v1735 = vadd.f32 0.0, %v1734
    %1736 = vmatmul.f32.gmra.mxu0 %v1320
    %v1737 = vpop.f32.mrf.mxu0
    %v1738 = vadd.f32 0.0, %v1737
    %1739 = vmatmul.f32.gmra.mxu0 %v1323
    %v1740 = vpop.f32.mrf.mxu0
    %v1741 = vadd.f32 0.0, %v1740
    %1742 = vmatmul.f32.gmra.mxu0 %v1326
    %v1743 = vpop.f32.mrf.mxu0
    %v1744 = vadd.f32 0.0, %v1743
    %1745 = vmatmul.f32.gmra.mxu0 %v1329
    %v1746 = vpop.f32.mrf.mxu0
    %v1747 = vadd.f32 0.0, %v1746
    %1748 = vmatmul.f32.gmra.mxu0 %v1332
    %v1749 = vpop.f32.mrf.mxu0
    %v1750 = vadd.f32 0.0, %v1749
    %1751 = vmatmul.f32.gmra.mxu0 %v1335
    %v1752 = vpop.f32.mrf.mxu0
    %v1753 = vadd.f32 0.0, %v1752
    %1754 = vmatmul.f32.gmra.mxu0 %v1338
    %v1755 = vpop.f32.mrf.mxu0
    %v1756 = vadd.f32 0.0, %v1755
    %1757 = vmatmul.f32.gmra.mxu0 %v1341
    %v1758 = vpop.f32.mrf.mxu0
    %v1759 = vadd.f32 0.0, %v1758
    %1760 = vmatmul.f32.gmra.mxu0 %v1344
    %v1761 = vpop.f32.mrf.mxu0
    %v1762 = vadd.f32 0.0, %v1761
    %1763 = vmatmul.f32.gmra.mxu0 %v1347
    %v1764 = vpop.f32.mrf.mxu0
    %v1765 = vadd.f32 0.0, %v1764
    %1766 = vmatmul.f32.gmra.mxu0 %v1350
    %v1767 = vpop.f32.mrf.mxu0
    %v1768 = vadd.f32 0.0, %v1767
    %1769 = vmatmul.f32.gmra.mxu0 %v1353
    %v1770 = vpop.f32.mrf.mxu0
    %v1771 = vadd.f32 0.0, %v1770
    %1772 = vdwg.mxu0
    %1773 = vst [vmem:[#allocation3] sm:$0xff] %v1373
    %1774 = vst [vmem:[#allocation3 + $0x8] sm:$0xff] %v1582
    %1775 = vst [vmem:[#allocation3 + $0x10] sm:$0xff] %v1376
    %1776 = vst [vmem:[#allocation3 + $0x18] sm:$0xff] %v1585
    %1777 = vst [vmem:[#allocation3 + $0x20] sm:$0xff] %v1379
    %1778 = vst [vmem:[#allocation3 + $0x28] sm:$0xff] %v1588
    %1779 = vst [vmem:[#allocation3 + $0x30] sm:$0xff] %v1382
    %1780 = vst [vmem:[#allocation3 + $0x38] sm:$0xff] %v1591
    %1781 = vst [vmem:[#allocation3 + $0x40] sm:$0xff] %v1385
    %1782 = vst [vmem:[#allocation3 + $0x48] sm:$0xff] %v1594
    %1783 = vst [vmem:[#allocation3 + $0x50] sm:$0xff] %v1388
    %1784 = vst [vmem:[#allocation3 + $0x58] sm:$0xff] %v1597
    %1785 = vst [vmem:[#allocation3 + $0x60] sm:$0xff] %v1391
    %1786 = vst [vmem:[#allocation3 + $0x68] sm:$0xff] %v1600
    %1787 = vst [vmem:[#allocation3 + $0x70] sm:$0xff] %v1394
    %1788 = vst [vmem:[#allocation3 + $0x78] sm:$0xff] %v1603
    %1789 = vst [vmem:[#allocation3 + $0x80] sm:$0xff] %v1397
    %1790 = vst [vmem:[#allocation3 + $0x88] sm:$0xff] %v1606
    %1791 = vst [vmem:[#allocation3 + $0x90] sm:$0xff] %v1400
    %1792 = vst [vmem:[#allocation3 + $0x98] sm:$0xff] %v1609
    %1793 = vst [vmem:[#allocation3 + $0xa0] sm:$0xff] %v1403
    %1794 = vst [vmem:[#allocation3 + $0xa8] sm:$0xff] %v1612
    %1795 = vst [vmem:[#allocation3 + $0xb0] sm:$0xff] %v1406
    %1796 = vst [vmem:[#allocation3 + $0xb8] sm:$0xff] %v1615
    %1797 = vst [vmem:[#allocation3 + $0xc0] sm:$0xff] %v1409
    %1798 = vst [vmem:[#allocation3 + $0xc8] sm:$0xff] %v1618
    %1799 = vst [vmem:[#allocation3 + $0xd0] sm:$0xff] %v1412
    %1800 = vst [vmem:[#allocation3 + $0xd8] sm:$0xff] %v1621
    %1801 = vst [vmem:[#allocation3 + $0xe0] sm:$0xff] %v1415
    %1802 = vst [vmem:[#allocation3 + $0xe8] sm:$0xff] %v1624
    %1803 = vst [vmem:[#allocation3 + $0xf0] sm:$0xff] %v1418
    %1804 = vst [vmem:[#allocation3 + $0xf8] sm:$0xff] %v1627
    %1805 = vst [vmem:[#allocation3 + $0x100] sm:$0xff] %v1421
    %1806 = vst [vmem:[#allocation3 + $0x108] sm:$0xff] %v1630
    %1807 = vst [vmem:[#allocation3 + $0x110] sm:$0xff] %v1424
    %1808 = vst [vmem:[#allocation3 + $0x118] sm:$0xff] %v1633
    %1809 = vst [vmem:[#allocation3 + $0x120] sm:$0xff] %v1427
    %1810 = vst [vmem:[#allocation3 + $0x128] sm:$0xff] %v1636
    %1811 = vst [vmem:[#allocation3 + $0x130] sm:$0xff] %v1430
    %1812 = vst [vmem:[#allocation3 + $0x138] sm:$0xff] %v1639
    %1813 = vst [vmem:[#allocation3 + $0x140] sm:$0xff] %v1433
    %1814 = vst [vmem:[#allocation3 + $0x148] sm:$0xff] %v1642
    %1815 = vst [vmem:[#allocation3 + $0x150] sm:$0xff] %v1436
    %1816 = vst [vmem:[#allocation3 + $0x158] sm:$0xff] %v1645
    %1817 = vst [vmem:[#allocation3 + $0x160] sm:$0xff] %v1439
    %1818 = vst [vmem:[#allocation3 + $0x168] sm:$0xff] %v1648
    %1819 = vst [vmem:[#allocation3 + $0x170] sm:$0xff] %v1442
    %1820 = vst [vmem:[#allocation3 + $0x178] sm:$0xff] %v1651
    %1821 = vst [vmem:[#allocation3 + $0x180] sm:$0xff] %v1445
    %1822 = vst [vmem:[#allocation3 + $0x188] sm:$0xff] %v1654
    %1823 = vst [vmem:[#allocation3 + $0x190] sm:$0xff] %v1448
    %1824 = vst [vmem:[#allocation3 + $0x198] sm:$0xff] %v1657
    %1825 = vst [vmem:[#allocation3 + $0x1a0] sm:$0xff] %v1451
    %1826 = vst [vmem:[#allocation3 + $0x1a8] sm:$0xff] %v1660
    %1827 = vst [vmem:[#allocation3 + $0x1b0] sm:$0xff] %v1454
    %1828 = vst [vmem:[#allocation3 + $0x1b8] sm:$0xff] %v1663
    %1829 = vst [vmem:[#allocation3 + $0x1c0] sm:$0xff] %v1457
    %1830 = vst [vmem:[#allocation3 + $0x1c8] sm:$0xff] %v1666
    %1831 = vst [vmem:[#allocation3 + $0x1d0] sm:$0xff] %v1460
    %1832 = vst [vmem:[#allocation3 + $0x1d8] sm:$0xff] %v1669
    %1833 = vst [vmem:[#allocation3 + $0x1e0] sm:$0xff] %v1463
    %1834 = vst [vmem:[#allocation3 + $0x1e8] sm:$0xff] %v1672
    %1835 = vst [vmem:[#allocation3 + $0x1f0] sm:$0xff] %v1466
    %1836 = vst [vmem:[#allocation3 + $0x1f8] sm:$0xff] %v1675
    %1837 = vst [vmem:[#allocation3 + $0x200] sm:$0xff] %v1469
    %1838 = vst [vmem:[#allocation3 + $0x208] sm:$0xff] %v1678
    %1839 = vst [vmem:[#allocation3 + $0x210] sm:$0xff] %v1472
    %1840 = vst [vmem:[#allocation3 + $0x218] sm:$0xff] %v1681
    %1841 = vst [vmem:[#allocation3 + $0x220] sm:$0xff] %v1475
    %1842 = vst [vmem:[#allocation3 + $0x228] sm:$0xff] %v1684
    %1843 = vst [vmem:[#allocation3 + $0x230] sm:$0xff] %v1478
    %1844 = vst [vmem:[#allocation3 + $0x238] sm:$0xff] %v1687
    %1845 = vst [vmem:[#allocation3 + $0x240] sm:$0xff] %v1481
    %1846 = vst [vmem:[#allocation3 + $0x248] sm:$0xff] %v1690
    %1847 = vst [vmem:[#allocation3 + $0x250] sm:$0xff] %v1484
    %1848 = vst [vmem:[#allocation3 + $0x258] sm:$0xff] %v1693
    %1849 = vst [vmem:[#allocation3 + $0x260] sm:$0xff] %v1487
    %1850 = vst [vmem:[#allocation3 + $0x268] sm:$0xff] %v1696
    %1851 = vst [vmem:[#allocation3 + $0x270] sm:$0xff] %v1490
    %1852 = vst [vmem:[#allocation3 + $0x278] sm:$0xff] %v1699
    %1853 = vst [vmem:[#allocation3 + $0x280] sm:$0xff] %v1493
    %1854 = vst [vmem:[#allocation3 + $0x288] sm:$0xff] %v1702
    %1855 = vst [vmem:[#allocation3 + $0x290] sm:$0xff] %v1496
    %1856 = vst [vmem:[#allocation3 + $0x298] sm:$0xff] %v1705
    %1857 = vst [vmem:[#allocation3 + $0x2a0] sm:$0xff] %v1499
    %1858 = vst [vmem:[#allocation3 + $0x2a8] sm:$0xff] %v1708
    %1859 = vst [vmem:[#allocation3 + $0x2b0] sm:$0xff] %v1502
    %1860 = vst [vmem:[#allocation3 + $0x2b8] sm:$0xff] %v1711
    %1861 = vst [vmem:[#allocation3 + $0x2c0] sm:$0xff] %v1505
    %1862 = vst [vmem:[#allocation3 + $0x2c8] sm:$0xff] %v1714
    %1863 = vst [vmem:[#allocation3 + $0x2d0] sm:$0xff] %v1508
    %1864 = vst [vmem:[#allocation3 + $0x2d8] sm:$0xff] %v1717
    %1865 = vst [vmem:[#allocation3 + $0x2e0] sm:$0xff] %v1511
    %1866 = vst [vmem:[#allocation3 + $0x2e8] sm:$0xff] %v1720
    %1867 = vst [vmem:[#allocation3 + $0x2f0] sm:$0xff] %v1514
    %1868 = vst [vmem:[#allocation3 + $0x2f8] sm:$0xff] %v1723
    %1869 = vst [vmem:[#allocation3 + $0x300] sm:$0xff] %v1517
    %1870 = vst [vmem:[#allocation3 + $0x308] sm:$0xff] %v1726
    %1871 = vst [vmem:[#allocation3 + $0x310] sm:$0xff] %v1520
    %1872 = vst [vmem:[#allocation3 + $0x318] sm:$0xff] %v1729
    %1873 = vst [vmem:[#allocation3 + $0x320] sm:$0xff] %v1523
    %1874 = vst [vmem:[#allocation3 + $0x328] sm:$0xff] %v1732
    %1875 = vst [vmem:[#allocation3 + $0x330] sm:$0xff] %v1526
    %1876 = vst [vmem:[#allocation3 + $0x338] sm:$0xff] %v1735
    %1877 = vst [vmem:[#allocation3 + $0x340] sm:$0xff] %v1529
    %1878 = vst [vmem:[#allocation3 + $0x348] sm:$0xff] %v1738
    %1879 = vst [vmem:[#allocation3 + $0x350] sm:$0xff] %v1532
    %1880 = vst [vmem:[#allocation3 + $0x358] sm:$0xff] %v1741
    %1881 = vst [vmem:[#allocation3 + $0x360] sm:$0xff] %v1535
    %1882 = vst [vmem:[#allocation3 + $0x368] sm:$0xff] %v1744
    %1883 = vst [vmem:[#allocation3 + $0x370] sm:$0xff] %v1538
    %1884 = vst [vmem:[#allocation3 + $0x378] sm:$0xff] %v1747
    %1885 = vst [vmem:[#allocation3 + $0x380] sm:$0xff] %v1541
    %1886 = vst [vmem:[#allocation3 + $0x388] sm:$0xff] %v1750
    %1887 = vst [vmem:[#allocation3 + $0x390] sm:$0xff] %v1544
    %1888 = vst [vmem:[#allocation3 + $0x398] sm:$0xff] %v1753
    %1889 = vst [vmem:[#allocation3 + $0x3a0] sm:$0xff] %v1547
    %1890 = vst [vmem:[#allocation3 + $0x3a8] sm:$0xff] %v1756
    %1891 = vst [vmem:[#allocation3 + $0x3b0] sm:$0xff] %v1550
    %1892 = vst [vmem:[#allocation3 + $0x3b8] sm:$0xff] %v1759
    %1893 = vst [vmem:[#allocation3 + $0x3c0] sm:$0xff] %v1553
    %1894 = vst [vmem:[#allocation3 + $0x3c8] sm:$0xff] %v1762
    %1895 = vst [vmem:[#allocation3 + $0x3d0] sm:$0xff] %v1556
    %1896 = vst [vmem:[#allocation3 + $0x3d8] sm:$0xff] %v1765
    %1897 = vst [vmem:[#allocation3 + $0x3e0] sm:$0xff] %v1559
    %1898 = vst [vmem:[#allocation3 + $0x3e8] sm:$0xff] %v1768
    %1899 = vst [vmem:[#allocation3 + $0x3f0] sm:$0xff] %v1562
    %1900 = vst [vmem:[#allocation3 + $0x3f8] sm:$0xff] %v1771
    // Predicated region
    $region18: #{tpu_custom_call.1} parent=1 // pred_check
      _
    $region19: #{tpu_custom_call.1} parent=1 // pred_check_branch
      %1902 = sbr.rel (0) target = $region21
    $region20: #{tpu_custom_call.1} parent=1 // pred_region
      %1904 = vsyncadd [#allocation4], 0
      %s1905 = sshll.u32 [#allocation3], 4
      %s1906 = int_to_ptr.vmem [resolvable:$true] %s1905
      %s1907 = sshll.u32 %s3, 4
      %s1908 = int_to_ptr.hbm [resolvable:$true] %s1907
      %1913 = dma.vmem_to_hbm [thread:$0]  %s1906, 16384, %s1908, [#allocation4], 256, 256, 16
    $region21: #{tpu_custom_call.1} parent=1 // pred_fallthru
      _
    // Predicated region
    $region22: #{tpu_custom_call.1} parent=1 // pred_check
      _
    $region23: #{tpu_custom_call.1} parent=1 // pred_check_branch
      %1915 = sbr.rel (0) target = $region25
    $region24: #{tpu_custom_call.1} parent=1 // pred_region
      %1917 = dma.done [#allocation4], 16384
    $region25: #{tpu_custom_call.1} parent=1 // pred_fallthru
      _
    %1918 = vsyncpa [#allocation4], 1

</llo_original>
